<compile_context>
chip_gen: v7x
topology: tpu7x:2x2x1
jax: 0.10.0
libtpu: 0.0.40
codegen_flags: <defaults>
</compile_context>

<pallas_src>
import jax
import jax.numpy as jnp
from jax.experimental import pallas as pl
from jax.experimental.pallas import tpu as pltpu

BN_EPS = 1e-5
NEG_BIG = -1e30                      # bias for padded class lanes: exp() underflows to 0
VMEM_LIMIT = 48 * 1024 * 1024        # safe on v5e/v6e (128 MiB) and v7x (64 MiB/TC)


def _elu(v):
    return jnp.where(v > 0, v, jnp.expm1(jnp.minimum(v, 0.0)))


def _round_up(v, m):
    return ((v + m - 1) // m) * m


def _pick_tile(n_pad, cap):
    """Largest power-of-two multiple of 256 that divides n_pad and is <= cap."""
    t = 256
    while t * 2 <= min(cap, n_pad) and n_pad % (t * 2) == 0:
        t *= 2
    return t


# ---------------------------------------------------------------------------
# Kernel A: x_hk = |S_k @ xl| for k = 1..4, K-blocked, emitted as one lane-dense [TM,4H] slab.
# ---------------------------------------------------------------------------
def scatter_abs_kernel(s_rest_ref, xl_ref, xh_ref, acc_ref):
    k = pl.program_id(1)

    @pl.when(k == 0)
    def _():
        acc_ref[...] = jnp.zeros_like(acc_ref)

    tm = s_rest_ref.shape[1]
    tk = s_rest_ref.shape[2]
    # One MXU pass for all four S_k: merge the leading (4, TM) dims (layout-free collapse).
    s_flat = s_rest_ref[...].reshape(4 * tm, tk)
    acc_ref[...] += jnp.dot(s_flat, xl_ref[...], preferred_element_type=jnp.float32)

    @pl.when(k == pl.num_programs(1) - 1)
    def _():
        a = jnp.abs(acc_ref[...])                               # [4*TM, H] f32
        parts = [a[i * tm:(i + 1) * tm, :] for i in range(4)]   # static slices
        # (4,TM,H) -> (TM,4H) relayout: XLU work, once per row tile, hidden under S DMA.
        xh_ref[...] = jnp.concatenate(parts, axis=1).astype(xh_ref.dtype)


# ---------------------------------------------------------------------------
# Kernel B: all 5 branches (K-blocked) + folded per-branch MLPs + head + log_softmax.
# ---------------------------------------------------------------------------
def sepnet_stage2_kernel(s0_ref, xl5_ref, xl_ref, w_fold_ref, b_fold_ref,
                         bnf_ref, w_out_ref, b_out_ref, out_ref, z_ref):
    k = pl.program_id(1)

    @pl.when(k == 0)
    def _():
        z_ref[...] = jnp.zeros_like(z_ref)

    # [x0 | x1 | x2 | x3 | x4] accumulated over the contraction axis (one wide matmul).
    z_ref[...] += jnp.dot(s0_ref[...], xl5_ref[...], preferred_element_type=jnp.float32)

    @pl.when(k == pl.num_programs(1) - 1)
    def _():
        e = _elu(z_ref[...])                                    # ELU (eval Dropout = identity)
        # BatchNorm folded into branch linears -> single [TM,5H] x [5H,H] matmul + residual.
        acc = xl_ref[...] + jnp.dot(e, w_fold_ref[...],
                                    preferred_element_type=jnp.float32) + b_fold_ref[...]
        # final mlp: BN (pre-folded scale/shift) -> ELU -> Linear
        v = _elu(acc * bnf_ref[0:1, :] + bnf_ref[1:2, :])
        logits = jnp.dot(v, w_out_ref[...], preferred_element_type=jnp.float32) + b_out_ref[...]
        # log_softmax; padded class lanes carry NEG_BIG bias so exp() underflows to 0
        m = jnp.max(logits, axis=1, keepdims=True)
        zc = logits - m
        lse = jnp.log(jnp.sum(jnp.exp(zc), axis=1, keepdims=True))
        out_ref[...] = zc - lse


def sepnet_forward(x, S, params, *, max_tm_a=512, max_tm_b=512, max_tk=2048):
    N = x.shape[0]
    H = params["W_in"].shape[1]
    C = params["W_out"].shape[1]
    CP = _round_up(C, 128)              # lane-dense padded class width
    f32 = jnp.float32
    bf16 = jnp.bfloat16

    # Pad N (rows of xl, rows+cols of S) to a multiple of 256: row tiles never shrink to 8
    # and awkward N never falls back to a whole-array grid=(1,) kernel.
    N_pad = _round_up(max(N, 256), 256)

    # ---- tile sizing: decoupled TM_A / TM_B, VMEM-bounded; K-blocking removes N scaling ----
    tk_vmem_cap = max(256, (12 * 1024 * 1024) // (20 * H))    # xl5 [TK,5H] bf16 double-buffered
    tm_b_vmem_cap = max(256, (8 * 1024 * 1024) // (20 * H))   # z_acc [TM_B,5H] f32 scratch
    TM_A = _pick_tile(N_pad, max_tm_a)
    TM_B = _pick_tile(N_pad, min(max_tm_b, tm_b_vmem_cap))
    TK = _pick_tile(N_pad, min(max_tk, tk_vmem_cap))
    n_m_a, n_m_b, n_k = N_pad // TM_A, N_pad // TM_B, N_pad // TK

    # ---- wrapper-side precompute (tiny XLA ops) ---------------------------------------------
    xl = x.astype(f32) @ params["W_in"] + params["b_in"]                      # [N, H]
    if N_pad == N:
        xl_pad = xl
        S_bf = S.astype(bf16)
    else:
        xl_pad = jnp.zeros((N_pad, H), f32).at[:N].set(xl)
        S_bf = jnp.zeros((5, N_pad, N_pad), bf16).at[:, :N, :N].set(S.astype(bf16))
    s0_bf, s_rest_bf = S_bf[0], S_bf[1:5]
    xl_bf = xl_pad.astype(bf16)

    # fold BatchNorm (eval) into each branch Linear: W' = W * s, b' = b*s + t
    bn = params["bn_mlp"]                                                     # [5, 4, H]
    scale = bn[:, 0] * jax.lax.rsqrt(bn[:, 3] + BN_EPS)                       # [5, H]
    shift = bn[:, 1] - bn[:, 2] * scale                                       # [5, H]
    w_fold = (params["W_mlp"] * scale[:, None, :]).reshape(5 * H, H)          # [5H, H]
    b_fold = (params["b_mlp"][:, 0, :] * scale + shift).sum(axis=0)[None, :]  # [1, H]

    bnf = params["bn_f"]                                                      # [4, H]
    sf = bnf[0] * jax.lax.rsqrt(bnf[3] + BN_EPS)
    tf = bnf[1] - bnf[2] * sf
    bnf_fold = jnp.stack([sf, tf], axis=0)                                    # [2, H]

    w_out_pad = jnp.zeros((H, CP), f32).at[:, :C].set(params["W_out"])
    b_out_pad = jnp.full((1, CP), NEG_BIG, f32).at[:, :C].set(params["b_out"])

    cparams = pltpu.CompilerParams(
        dimension_semantics=("parallel", "arbitrary"),   # row tiles parallel, contraction last
        vmem_limit_bytes=VMEM_LIMIT,
    )

    # ---- Kernel A: x_hk = |S_k @ xl|, k = 1..4 -----------------------------------------------
    cost_a = pl.CostEstimate(
        flops=2 * 4 * N_pad * N_pad * H,
        transcendentals=0,
        bytes_accessed=4 * N_pad * N_pad * 2 + n_m_a * N_pad * H * 2 + N_pad * 4 * H * 2,
    )
    xh = pl.pallas_call(
        scatter_abs_kernel,
        out_shape=jax.ShapeDtypeStruct((N_pad, 4 * H), bf16),
        grid=(n_m_a, n_k),
        in_specs=[
            pl.BlockSpec((4, TM_A, TK), lambda m, k: (0, m, k)),   # S[1:5] (dominant stream)
            pl.BlockSpec((TK, H), lambda m, k: (k, 0)),            # xl contraction slice
        ],
        out_specs=pl.BlockSpec((TM_A, 4 * H), lambda m, k: (m, 0)),
        scratch_shapes=[pltpu.VMEM((4 * TM_A, H), f32)],
        compiler_params=cparams,
        cost_estimate=cost_a,
    )(s_rest_bf, xl_bf)

    xl5 = jnp.concatenate([xl_bf, xh], axis=1)                     # [N_pad, 5H] bf16

    # ---- Kernel B: branches, folded MLPs, head, log-softmax ---------------------------------
    cost_b = pl.CostEstimate(
        flops=2 * N_pad * N_pad * 5 * H + 2 * N_pad * 5 * H * H + 2 * N_pad * H * CP,
        transcendentals=N_pad * (5 * H + H + CP),
        bytes_accessed=(N_pad * N_pad * 2 + n_m_b * N_pad * 5 * H * 2 + N_pad * H * 4
                        + 5 * H * H * 4 + H * CP * 4 + N_pad * CP * 4),
    )
    out_pad = pl.pallas_call(
        sepnet_stage2_kernel,
        out_shape=jax.ShapeDtypeStruct((N_pad, CP), f32),
        grid=(n_m_b, n_k),
        in_specs=[
            pl.BlockSpec((TM_B, TK), lambda m, k: (m, k)),         # S0 (dominant stream)
            pl.BlockSpec((TK, 5 * H), lambda m, k: (k, 0)),        # [xl | XH] contraction slice
            pl.BlockSpec((TM_B, H), lambda m, k: (m, 0)),          # xl residual (f32)
            pl.BlockSpec((5 * H, H), lambda m, k: (0, 0)),         # folded branch weights
            pl.BlockSpec((1, H), lambda m, k: (0, 0)),             # folded branch bias
            pl.BlockSpec((2, H), lambda m, k: (0, 0)),             # folded final BN scale/shift
            pl.BlockSpec((H, CP), lambda m, k: (0, 0)),            # padded output weights
            pl.BlockSpec((1, CP), lambda m, k: (0, 0)),            # padded output bias
        ],
        out_specs=pl.BlockSpec((TM_B, CP), lambda m, k: (m, 0)),   # lane-dense stores (CP=128)
        scratch_shapes=[pltpu.VMEM((TM_B, 5 * H), f32)],
        compiler_params=cparams,
        cost_estimate=cost_b,
    )(s0_bf, xl5, xl_pad, w_fold, b_fold, bnf_fold, w_out_pad, b_out_pad)

    return out_pad[:N, :C]


# ---------------------------------------------------------------------------
# Pure-JAX reference (f32, mirrors the PyTorch module in eval mode)
# ---------------------------------------------------------------------------
def sepnet_reference(x, S, p):
    xl = x @ p["W_in"] + p["b_in"]
    branches = [S[0] @ xl] + [S[0] @ jnp.abs(S[k] @ xl) for k in range(1, 5)]
    acc = xl
    for i in range(5):
        b = branches[i]
        e = jnp.where(b > 0, b, jnp.expm1(jnp.minimum(b, 0.0)))
        lin = e @ p["W_mlp"][i] + p["b_mlp"][i]
        bn = p["bn_mlp"][i]
        acc = acc + (lin - bn[2:3]) / jnp.sqrt(bn[3:4] + BN_EPS) * bn[0:1] + bn[1:2]
    bnf = p["bn_f"]
    v = (acc - bnf[2:3]) / jnp.sqrt(bnf[3:4] + BN_EPS) * bnf[0:1] + bnf[1:2]
    v = jnp.where(v > 0, v, jnp.expm1(jnp.minimum(v, 0.0)))
    logits = v @ p["W_out"] + p["b_out"]
    return jax.nn.log_softmax(logits, axis=1)


def _make_inputs(key, N, F, H, C, NS=5):
    ks = jax.random.split(key, 12)
    x = jax.random.normal(ks[0], (N, F), jnp.float32)
    # dense stand-ins for scatter_list sparse matrices (sparse-ish via mask), scaled with N
    mask = (jax.random.uniform(ks[1], (NS, N, N)) < 0.3).astype(jnp.float32)
    s_scale = 0.5 / jnp.sqrt(N / 16.0)
    S = jax.random.normal(ks[2], (NS, N, N), jnp.float32) * mask * s_scale
    params = {
        "W_in":  jax.random.normal(ks[3], (F, H), jnp.float32) * 0.1,
        "b_in":  jax.random.normal(ks[4], (1, H), jnp.float32) * 0.1,
        "W_mlp": jax.random.normal(ks[5], (NS, H, H), jnp.float32) * 0.1,
        "b_mlp": jax.random.normal(ks[6], (NS, 1, H), jnp.float32) * 0.1,
        # BatchNorm params per branch: rows = gamma, beta, running_mean, running_var
        "bn_mlp": jnp.stack([
            1.0 + 0.1 * jax.random.normal(ks[7], (NS, H), jnp.float32),
            0.1 * jax.random.normal(ks[8], (NS, H), jnp.float32),
            0.1 * jax.random.normal(ks[9], (NS, H), jnp.float32),
            0.5 + jax.random.uniform(ks[10], (NS, H), jnp.float32),
        ], axis=1),                                                        # [NS, 4, H]
        "bn_f": jnp.stack([
            jnp.ones((H,), jnp.float32), jnp.zeros((H,), jnp.float32),
            jnp.zeros((H,), jnp.float32), jnp.ones((H,), jnp.float32),
        ], axis=0),                                                        # [4, H]
        "W_out": jax.random.normal(ks[11], (H, C), jnp.float32) * 0.1,
        "b_out": jnp.zeros((1, C), jnp.float32),
    }
    return x, S, params


if __name__ == "__main__":
    F, H, C = 16, 32, 4
    key = jax.random.PRNGKey(0)
    k1, k2 = jax.random.split(key)

    # test 1: tiny graph (N=16) -> padded to 256, single (m,k) tile.
    x, S, params = _make_inputs(k1, 16, F, H, C)
    out = jax.block_until_ready(sepnet_forward(x, S, params))
    ref = sepnet_reference(x, S, params)
    assert out.shape == (16, C)
    # bf16 S / scatter operands introduce small quantization error vs the f32 reference
    assert jnp.allclose(out, ref, rtol=3e-2, atol=3e-2), "mismatch (N=16) vs pure-JAX reference"

    # test 2: awkward N=300 -> padded to 512; small tile caps force a 2x2 (m,k) grid so the
    # pl.when accumulator init/finalize and multi-tile pipelining paths are exercised.
    x2, S2, params2 = _make_inputs(k2, 300, F, H, C)
    out2 = jax.block_until_ready(
        sepnet_forward(x2, S2, params2, max_tm_a=256, max_tm_b=256, max_tk=256))
    ref2 = sepnet_reference(x2, S2, params2)
    assert out2.shape == (300, C)
    assert jnp.allclose(out2, ref2, rtol=3e-2, atol=3e-2), "mismatch (N=300) vs pure-JAX reference"

    print("KERNEL_OK")
</pallas_src>

<mosaic_0001>
module attributes {stable_mosaic.version = 11 : i64} {
  func.func @scatter_abs_kernel(%arg0: i32, %arg1: i32, %arg2: memref<4x256x256xbf16, #tpu.memory_space<vmem>>, %arg3: memref<256x32xbf16, #tpu.memory_space<vmem>>, %arg4: memref<256x128xbf16, #tpu.memory_space<vmem>>, %arg5: memref<1024x32xf32, #tpu.memory_space<vmem>>) attributes {dimension_semantics = [#tpu.dimension_semantics<parallel>, #tpu.dimension_semantics<arbitrary>], iteration_bounds = array<i64: 1, 1>, scalar_prefetch = 0 : i64, scratch_operands = 1 : i64, tpu.core_type = #tpu.core_type<tc>, window_params = [{transform_indices = @transform_0, window_bounds = array<i64: 4, 256, 256>}, {transform_indices = @transform_1, window_bounds = array<i64: 256, 32>}, {transform_indices = @transform_2, window_bounds = array<i64: 256, 128>}]} {
    %c0_i32 = arith.constant 0 : i32
    %0 = arith.cmpi eq, %arg1, %c0_i32 : i32
    %1 = arith.extui %0 : i1 to i32
    %c0_i32_0 = arith.constant 0 : i32
    %2 = arith.cmpi ne, %1, %c0_i32_0 : i32
    scf.if %2 {
      %cst_11 = arith.constant 0.000000e+00 : f32
      %13 = vector.broadcast %cst_11 : f32 to vector<1024x32xf32>
      %c0_12 = arith.constant 0 : index
      %c0_13 = arith.constant 0 : index
      %14 = vector.load %arg5[%c0_12, %c0_13] : memref<1024x32xf32, #tpu.memory_space<vmem>>, vector<1024x32xf32>
      tpu.vector_store %arg5[%c0_12, %c0_13], %13 {strides = array<i32>} : memref<1024x32xf32, #tpu.memory_space<vmem>>, vector<1024x32xf32>,
    } else {
    }
    %c0 = arith.constant 0 : index
    %c0_1 = arith.constant 0 : index
    %c0_2 = arith.constant 0 : index
    %3 = vector.load %arg2[%c0, %c0_1, %c0_2] : memref<4x256x256xbf16, #tpu.memory_space<vmem>>, vector<4x256x256xbf16>
    %4 = vector.shape_cast %3 : vector<4x256x256xbf16> to vector<1024x256xbf16>
    %c0_3 = arith.constant 0 : index
    %c0_4 = arith.constant 0 : index
    %5 = vector.load %arg5[%c0_3, %c0_4] : memref<1024x32xf32, #tpu.memory_space<vmem>>, vector<1024x32xf32>
    %c0_5 = arith.constant 0 : index
    %c0_6 = arith.constant 0 : index
    %6 = vector.load %arg3[%c0_5, %c0_6] : memref<256x32xbf16, #tpu.memory_space<vmem>>, vector<256x32xbf16>
    %cst = arith.constant dense<0.000000e+00> : vector<1024x32xf32>
    %7 = tpu.matmul %4, %6, %cst {dimension_numbers = #tpu.dot_dimension_numbers<[1], [0], [0], [1], [0, 0, 1, 1], [], []>} : vector<1024x256xbf16>, vector<256x32xbf16>, vector<1024x32xf32> -> vector<1024x32xf32>
    %8 = arith.addf %5, %7 : vector<1024x32xf32>
    %c0_7 = arith.constant 0 : index
    %c0_8 = arith.constant 0 : index
    %9 = vector.load %arg5[%c0_7, %c0_8] : memref<1024x32xf32, #tpu.memory_space<vmem>>, vector<1024x32xf32>
    tpu.vector_store %arg5[%c0_7, %c0_8], %8 {strides = array<i32>} : memref<1024x32xf32, #tpu.memory_space<vmem>>, vector<1024x32xf32>,
    %c0_i32_9 = arith.constant 0 : i32
    %10 = arith.cmpi eq, %arg1, %c0_i32_9 : i32
    %11 = arith.extui %10 : i1 to i32
    %c0_i32_10 = arith.constant 0 : i32
    %12 = arith.cmpi ne, %11, %c0_i32_10 : i32
    scf.if %12 {
      %c0_11 = arith.constant 0 : index
      %c0_12 = arith.constant 0 : index
      %13 = vector.load %arg5[%c0_11, %c0_12] : memref<1024x32xf32, #tpu.memory_space<vmem>>, vector<1024x32xf32>
      %14 = math.absf %13 : vector<1024x32xf32>
      %15 = vector.extract_strided_slice %14 {offsets = [0, 0], sizes = [256, 32], strides = [1, 1]} : vector<1024x32xf32> to vector<256x32xf32>
      %16 = vector.extract_strided_slice %14 {offsets = [256, 0], sizes = [256, 32], strides = [1, 1]} : vector<1024x32xf32> to vector<256x32xf32>
      %17 = vector.extract_strided_slice %14 {offsets = [512, 0], sizes = [256, 32], strides = [1, 1]} : vector<1024x32xf32> to vector<256x32xf32>
      %18 = vector.extract_strided_slice %14 {offsets = [768, 0], sizes = [256, 32], strides = [1, 1]} : vector<1024x32xf32> to vector<256x32xf32>
      %19 = tpu.concatenate %15, %16, %17, %18 in 1 : vector<256x32xf32>, vector<256x32xf32>, vector<256x32xf32>, vector<256x32xf32> -> vector<256x128xf32>
      %20 = arith.truncf %19 : vector<256x128xf32> to vector<256x128xbf16>
      %c0_13 = arith.constant 0 : index
      %c0_14 = arith.constant 0 : index
      %21 = vector.load %arg4[%c0_13, %c0_14] : memref<256x128xbf16, #tpu.memory_space<vmem>>, vector<256x128xbf16>
      tpu.vector_store %arg4[%c0_13, %c0_14], %20 {strides = array<i32>} : memref<256x128xbf16, #tpu.memory_space<vmem>>, vector<256x128xbf16>,
    } else {
    }
    return
  }
  func.func @transform_0(%arg0: i32, %arg1: i32) -> (i32, i32, i32) {
    %c0_i32 = arith.constant 0 : i32
    %c0_i32_0 = arith.constant 0 : i32
    return %c0_i32, %arg0, %arg1 : i32, i32, i32
  }
  func.func @transform_1(%arg0: i32, %arg1: i32) -> (i32, i32) {
    %c0_i32 = arith.constant 0 : i32
    %c0_i32_0 = arith.constant 0 : i32
    return %arg1, %c0_i32 : i32, i32
  }
  func.func @transform_2(%arg0: i32, %arg1: i32) -> (i32, i32) {
    %c0_i32 = arith.constant 0 : i32
    %c0_i32_0 = arith.constant 0 : i32
    return %arg0, %c0_i32 : i32, i32
  }
}

</mosaic_0001>

<llo_original>
// kernel: tpu_custom_call.1
$region0: #{tpu_custom_call.1}
  #allocation0 [shape = 'u32[]', space=smem, size = 0x4, offset = 0x4, fixed_abs, tag = 'smem constant byte address 0x4 - core index']
  #allocation1 [shape = 'u32[144,128]{1,0:T(1,128)}', space=vmem, size = 0x12000, scoped, tag = 'internal scratch']
  #allocation2 [shape = 'f32[1024,32]{1,0:T(8,128)}', space=vmem, size = 0x80000, scoped, tag = 'scratch operand']
  %s0 = inlined_call_operand.hbm [shape: bf16[4,256,256], index: 0, kind: input, shape index: {}]
  %s1 = inlined_call_operand.vmem [shape: bf16[256,32], index: 1, kind: input, shape index: {}]
  %s2 = inlined_call_operand.hbm [shape: bf16[256,128], index: 2, kind: output, shape index: {}]
  %s3 = sld [smem:[#allocation0]]
  $region30: #{tpu_custom_call.1} parent=0
    _
  %s5 = ssub.s32 1, %s3
  %s6 = scalar_select 0, %s5, %s3
  $region1: #{tpu_custom_call.1} parent=0
    #allocation3 [shape = 'u8[524288]{0}', space=vmem, size = 0x80000, scoped, tag = 'input window, operand 0, single buffered']
    #allocation4 [shape = 's32[1]{0}', space=sflag, size = 0x4, scoped, tag = 'scoped memory for tpu_custom_call.1']
    #allocation5 [shape = 's32[1]{0}', space=sflag, size = 0x4, scoped, tag = 'scoped memory for tpu_custom_call.1']
    #allocation6 [shape = 'u8[65536]{0}', space=vmem, size = 0x10000, scoped, tag = 'output window, operand 0, single buffered']
    %7 = vsyncpa [#allocation4], 0
    %8 = vsyncpa [#allocation5], 0
    // Predicated region
    $region2: #{tpu_custom_call.1} parent=1 // pred_check
      _
    $region3: #{tpu_custom_call.1} parent=1 // pred_check_branch
      %10 = sbr.rel (0) target = $region5
    $region4: #{tpu_custom_call.1} parent=1 // pred_region
      %s12 = ssub.s32 16384, 16384
      %13 = vsyncadd [#allocation4], %s12
      %s14 = sshll.u32 [#allocation3], 4
      %s15 = int_to_ptr.vmem [resolvable:$true] %s14
      %20 = dma.hbm_to_vmem [thread:$0]  %s0, 16384, %s15, [#allocation4], 128, 128, 8
    $region5: #{tpu_custom_call.1} parent=1 // pred_fallthru
      _
    // Predicated region
    $region6: #{tpu_custom_call.1} parent=1 // pred_check
      _
    $region7: #{tpu_custom_call.1} parent=1 // pred_check_branch
      %22 = sbr.rel (0) target = $region9
    $region8: #{tpu_custom_call.1} parent=1 // pred_region
      _
    $region9: #{tpu_custom_call.1} parent=1 // pred_fallthru
      _
    // Predicated region
    $region10: #{tpu_custom_call.1} parent=1 // pred_check
      _
    $region11: #{tpu_custom_call.1} parent=1 // pred_check_branch
      %24 = sbr.rel (0) target = $region13
    $region12: #{tpu_custom_call.1} parent=1 // pred_region
      %25 = dma.done [#allocation4], 16384
    $region13: #{tpu_custom_call.1} parent=1 // pred_fallthru
      _
    %p27 = scmp.eq.s32.totalorder 0, 0
    // Predicated region
    $region14: #{tpu_custom_call.1} parent=1 // pred_check
      %p28 = pneg %p27
    $region15: #{tpu_custom_call.1} parent=1 // pred_check_branch
      %30 = sbr.rel (%p28) target = $region17
    $region16: #{tpu_custom_call.1} parent=1 // pred_region
      %vm31 = vcmask 261120
      %32 = vst.msk [vmem:[#allocation2] sm:$0xff] %vm31, 0.0
      %33 = vst.msk [vmem:[#allocation2 + $0x8] sm:$0xff] %vm31, 0.0
      %34 = vst.msk [vmem:[#allocation2 + $0x10] sm:$0xff] %vm31, 0.0
      %35 = vst.msk [vmem:[#allocation2 + $0x18] sm:$0xff] %vm31, 0.0
      %36 = vst.msk [vmem:[#allocation2 + $0x20] sm:$0xff] %vm31, 0.0
      %37 = vst.msk [vmem:[#allocation2 + $0x28] sm:$0xff] %vm31, 0.0
      %38 = vst.msk [vmem:[#allocation2 + $0x30] sm:$0xff] %vm31, 0.0
      %39 = vst.msk [vmem:[#allocation2 + $0x38] sm:$0xff] %vm31, 0.0
      %40 = vst.msk [vmem:[#allocation2 + $0x40] sm:$0xff] %vm31, 0.0
      %41 = vst.msk [vmem:[#allocation2 + $0x48] sm:$0xff] %vm31, 0.0
      %42 = vst.msk [vmem:[#allocation2 + $0x50] sm:$0xff] %vm31, 0.0
      %43 = vst.msk [vmem:[#allocation2 + $0x58] sm:$0xff] %vm31, 0.0
      %44 = vst.msk [vmem:[#allocation2 + $0x60] sm:$0xff] %vm31, 0.0
      %45 = vst.msk [vmem:[#allocation2 + $0x68] sm:$0xff] %vm31, 0.0
      %46 = vst.msk [vmem:[#allocation2 + $0x70] sm:$0xff] %vm31, 0.0
      %47 = vst.msk [vmem:[#allocation2 + $0x78] sm:$0xff] %vm31, 0.0
      %48 = vst.msk [vmem:[#allocation2 + $0x80] sm:$0xff] %vm31, 0.0
      %49 = vst.msk [vmem:[#allocation2 + $0x88] sm:$0xff] %vm31, 0.0
      %50 = vst.msk [vmem:[#allocation2 + $0x90] sm:$0xff] %vm31, 0.0
      %51 = vst.msk [vmem:[#allocation2 + $0x98] sm:$0xff] %vm31, 0.0
      %52 = vst.msk [vmem:[#allocation2 + $0xa0] sm:$0xff] %vm31, 0.0
      %53 = vst.msk [vmem:[#allocation2 + $0xa8] sm:$0xff] %vm31, 0.0
      %54 = vst.msk [vmem:[#allocation2 + $0xb0] sm:$0xff] %vm31, 0.0
      %55 = vst.msk [vmem:[#allocation2 + $0xb8] sm:$0xff] %vm31, 0.0
      %56 = vst.msk [vmem:[#allocation2 + $0xc0] sm:$0xff] %vm31, 0.0
      %57 = vst.msk [vmem:[#allocation2 + $0xc8] sm:$0xff] %vm31, 0.0
      %58 = vst.msk [vmem:[#allocation2 + $0xd0] sm:$0xff] %vm31, 0.0
      %59 = vst.msk [vmem:[#allocation2 + $0xd8] sm:$0xff] %vm31, 0.0
      %60 = vst.msk [vmem:[#allocation2 + $0xe0] sm:$0xff] %vm31, 0.0
      %61 = vst.msk [vmem:[#allocation2 + $0xe8] sm:$0xff] %vm31, 0.0
      %62 = vst.msk [vmem:[#allocation2 + $0xf0] sm:$0xff] %vm31, 0.0
      %63 = vst.msk [vmem:[#allocation2 + $0xf8] sm:$0xff] %vm31, 0.0
      %64 = vst.msk [vmem:[#allocation2 + $0x100] sm:$0xff] %vm31, 0.0
      %65 = vst.msk [vmem:[#allocation2 + $0x108] sm:$0xff] %vm31, 0.0
      %66 = vst.msk [vmem:[#allocation2 + $0x110] sm:$0xff] %vm31, 0.0
      %67 = vst.msk [vmem:[#allocation2 + $0x118] sm:$0xff] %vm31, 0.0
      %68 = vst.msk [vmem:[#allocation2 + $0x120] sm:$0xff] %vm31, 0.0
      %69 = vst.msk [vmem:[#allocation2 + $0x128] sm:$0xff] %vm31, 0.0
      %70 = vst.msk [vmem:[#allocation2 + $0x130] sm:$0xff] %vm31, 0.0
      %71 = vst.msk [vmem:[#allocation2 + $0x138] sm:$0xff] %vm31, 0.0
      %72 = vst.msk [vmem:[#allocation2 + $0x140] sm:$0xff] %vm31, 0.0
      %73 = vst.msk [vmem:[#allocation2 + $0x148] sm:$0xff] %vm31, 0.0
      %74 = vst.msk [vmem:[#allocation2 + $0x150] sm:$0xff] %vm31, 0.0
      %75 = vst.msk [vmem:[#allocation2 + $0x158] sm:$0xff] %vm31, 0.0
      %76 = vst.msk [vmem:[#allocation2 + $0x160] sm:$0xff] %vm31, 0.0
      %77 = vst.msk [vmem:[#allocation2 + $0x168] sm:$0xff] %vm31, 0.0
      %78 = vst.msk [vmem:[#allocation2 + $0x170] sm:$0xff] %vm31, 0.0
      %79 = vst.msk [vmem:[#allocation2 + $0x178] sm:$0xff] %vm31, 0.0
      %80 = vst.msk [vmem:[#allocation2 + $0x180] sm:$0xff] %vm31, 0.0
      %81 = vst.msk [vmem:[#allocation2 + $0x188] sm:$0xff] %vm31, 0.0
      %82 = vst.msk [vmem:[#allocation2 + $0x190] sm:$0xff] %vm31, 0.0
      %83 = vst.msk [vmem:[#allocation2 + $0x198] sm:$0xff] %vm31, 0.0
      %84 = vst.msk [vmem:[#allocation2 + $0x1a0] sm:$0xff] %vm31, 0.0
      %85 = vst.msk [vmem:[#allocation2 + $0x1a8] sm:$0xff] %vm31, 0.0
      %86 = vst.msk [vmem:[#allocation2 + $0x1b0] sm:$0xff] %vm31, 0.0
      %87 = vst.msk [vmem:[#allocation2 + $0x1b8] sm:$0xff] %vm31, 0.0
      %88 = vst.msk [vmem:[#allocation2 + $0x1c0] sm:$0xff] %vm31, 0.0
      %89 = vst.msk [vmem:[#allocation2 + $0x1c8] sm:$0xff] %vm31, 0.0
      %90 = vst.msk [vmem:[#allocation2 + $0x1d0] sm:$0xff] %vm31, 0.0
      %91 = vst.msk [vmem:[#allocation2 + $0x1d8] sm:$0xff] %vm31, 0.0
      %92 = vst.msk [vmem:[#allocation2 + $0x1e0] sm:$0xff] %vm31, 0.0
      %93 = vst.msk [vmem:[#allocation2 + $0x1e8] sm:$0xff] %vm31, 0.0
      %94 = vst.msk [vmem:[#allocation2 + $0x1f0] sm:$0xff] %vm31, 0.0
      %95 = vst.msk [vmem:[#allocation2 + $0x1f8] sm:$0xff] %vm31, 0.0
      %96 = vst.msk [vmem:[#allocation2 + $0x200] sm:$0xff] %vm31, 0.0
      %97 = vst.msk [vmem:[#allocation2 + $0x208] sm:$0xff] %vm31, 0.0
      %98 = vst.msk [vmem:[#allocation2 + $0x210] sm:$0xff] %vm31, 0.0
      %99 = vst.msk [vmem:[#allocation2 + $0x218] sm:$0xff] %vm31, 0.0
      %100 = vst.msk [vmem:[#allocation2 + $0x220] sm:$0xff] %vm31, 0.0
      %101 = vst.msk [vmem:[#allocation2 + $0x228] sm:$0xff] %vm31, 0.0
      %102 = vst.msk [vmem:[#allocation2 + $0x230] sm:$0xff] %vm31, 0.0
      %103 = vst.msk [vmem:[#allocation2 + $0x238] sm:$0xff] %vm31, 0.0
      %104 = vst.msk [vmem:[#allocation2 + $0x240] sm:$0xff] %vm31, 0.0
      %105 = vst.msk [vmem:[#allocation2 + $0x248] sm:$0xff] %vm31, 0.0
      %106 = vst.msk [vmem:[#allocation2 + $0x250] sm:$0xff] %vm31, 0.0
      %107 = vst.msk [vmem:[#allocation2 + $0x258] sm:$0xff] %vm31, 0.0
      %108 = vst.msk [vmem:[#allocation2 + $0x260] sm:$0xff] %vm31, 0.0
      %109 = vst.msk [vmem:[#allocation2 + $0x268] sm:$0xff] %vm31, 0.0
      %110 = vst.msk [vmem:[#allocation2 + $0x270] sm:$0xff] %vm31, 0.0
      %111 = vst.msk [vmem:[#allocation2 + $0x278] sm:$0xff] %vm31, 0.0
      %112 = vst.msk [vmem:[#allocation2 + $0x280] sm:$0xff] %vm31, 0.0
      %113 = vst.msk [vmem:[#allocation2 + $0x288] sm:$0xff] %vm31, 0.0
      %114 = vst.msk [vmem:[#allocation2 + $0x290] sm:$0xff] %vm31, 0.0
      %115 = vst.msk [vmem:[#allocation2 + $0x298] sm:$0xff] %vm31, 0.0
      %116 = vst.msk [vmem:[#allocation2 + $0x2a0] sm:$0xff] %vm31, 0.0
      %117 = vst.msk [vmem:[#allocation2 + $0x2a8] sm:$0xff] %vm31, 0.0
      %118 = vst.msk [vmem:[#allocation2 + $0x2b0] sm:$0xff] %vm31, 0.0
      %119 = vst.msk [vmem:[#allocation2 + $0x2b8] sm:$0xff] %vm31, 0.0
      %120 = vst.msk [vmem:[#allocation2 + $0x2c0] sm:$0xff] %vm31, 0.0
      %121 = vst.msk [vmem:[#allocation2 + $0x2c8] sm:$0xff] %vm31, 0.0
      %122 = vst.msk [vmem:[#allocation2 + $0x2d0] sm:$0xff] %vm31, 0.0
      %123 = vst.msk [vmem:[#allocation2 + $0x2d8] sm:$0xff] %vm31, 0.0
      %124 = vst.msk [vmem:[#allocation2 + $0x2e0] sm:$0xff] %vm31, 0.0
      %125 = vst.msk [vmem:[#allocation2 + $0x2e8] sm:$0xff] %vm31, 0.0
      %126 = vst.msk [vmem:[#allocation2 + $0x2f0] sm:$0xff] %vm31, 0.0
      %127 = vst.msk [vmem:[#allocation2 + $0x2f8] sm:$0xff] %vm31, 0.0
      %128 = vst.msk [vmem:[#allocation2 + $0x300] sm:$0xff] %vm31, 0.0
      %129 = vst.msk [vmem:[#allocation2 + $0x308] sm:$0xff] %vm31, 0.0
      %130 = vst.msk [vmem:[#allocation2 + $0x310] sm:$0xff] %vm31, 0.0
      %131 = vst.msk [vmem:[#allocation2 + $0x318] sm:$0xff] %vm31, 0.0
      %132 = vst.msk [vmem:[#allocation2 + $0x320] sm:$0xff] %vm31, 0.0
      %133 = vst.msk [vmem:[#allocation2 + $0x328] sm:$0xff] %vm31, 0.0
      %134 = vst.msk [vmem:[#allocation2 + $0x330] sm:$0xff] %vm31, 0.0
      %135 = vst.msk [vmem:[#allocation2 + $0x338] sm:$0xff] %vm31, 0.0
      %136 = vst.msk [vmem:[#allocation2 + $0x340] sm:$0xff] %vm31, 0.0
      %137 = vst.msk [vmem:[#allocation2 + $0x348] sm:$0xff] %vm31, 0.0
      %138 = vst.msk [vmem:[#allocation2 + $0x350] sm:$0xff] %vm31, 0.0
      %139 = vst.msk [vmem:[#allocation2 + $0x358] sm:$0xff] %vm31, 0.0
      %140 = vst.msk [vmem:[#allocation2 + $0x360] sm:$0xff] %vm31, 0.0
      %141 = vst.msk [vmem:[#allocation2 + $0x368] sm:$0xff] %vm31, 0.0
      %142 = vst.msk [vmem:[#allocation2 + $0x370] sm:$0xff] %vm31, 0.0
      %143 = vst.msk [vmem:[#allocation2 + $0x378] sm:$0xff] %vm31, 0.0
      %144 = vst.msk [vmem:[#allocation2 + $0x380] sm:$0xff] %vm31, 0.0
      %145 = vst.msk [vmem:[#allocation2 + $0x388] sm:$0xff] %vm31, 0.0
      %146 = vst.msk [vmem:[#allocation2 + $0x390] sm:$0xff] %vm31, 0.0
      %147 = vst.msk [vmem:[#allocation2 + $0x398] sm:$0xff] %vm31, 0.0
      %148 = vst.msk [vmem:[#allocation2 + $0x3a0] sm:$0xff] %vm31, 0.0
      %149 = vst.msk [vmem:[#allocation2 + $0x3a8] sm:$0xff] %vm31, 0.0
      %150 = vst.msk [vmem:[#allocation2 + $0x3b0] sm:$0xff] %vm31, 0.0
      %151 = vst.msk [vmem:[#allocation2 + $0x3b8] sm:$0xff] %vm31, 0.0
      %152 = vst.msk [vmem:[#allocation2 + $0x3c0] sm:$0xff] %vm31, 0.0
      %153 = vst.msk [vmem:[#allocation2 + $0x3c8] sm:$0xff] %vm31, 0.0
      %154 = vst.msk [vmem:[#allocation2 + $0x3d0] sm:$0xff] %vm31, 0.0
      %155 = vst.msk [vmem:[#allocation2 + $0x3d8] sm:$0xff] %vm31, 0.0
      %156 = vst.msk [vmem:[#allocation2 + $0x3e0] sm:$0xff] %vm31, 0.0
      %157 = vst.msk [vmem:[#allocation2 + $0x3e8] sm:$0xff] %vm31, 0.0
      %158 = vst.msk [vmem:[#allocation2 + $0x3f0] sm:$0xff] %vm31, 0.0
      %159 = vst.msk [vmem:[#allocation2 + $0x3f8] sm:$0xff] %vm31, 0.0
    $region17: #{tpu_custom_call.1} parent=1 // pred_fallthru
      _
    %v160 = vld [vmem:[#allocation3] sm:$0xff]
    %v161 = vld [vmem:[#allocation3 + $0x8] sm:$0xff]
    %v162 = vld [vmem:[#allocation3 + $0x10] sm:$0xff]
    %v163 = vld [vmem:[#allocation3 + $0x18] sm:$0xff]
    %v164 = vld [vmem:[#allocation3 + $0x20] sm:$0xff]
    %v165 = vld [vmem:[#allocation3 + $0x28] sm:$0xff]
    %v166 = vld [vmem:[#allocation3 + $0x30] sm:$0xff]
    %v167 = vld [vmem:[#allocation3 + $0x38] sm:$0xff]
    %v168 = vld [vmem:[#allocation3 + $0x40] sm:$0xff]
    %v169 = vld [vmem:[#allocation3 + $0x48] sm:$0xff]
    %v170 = vld [vmem:[#allocation3 + $0x50] sm:$0xff]
    %v171 = vld [vmem:[#allocation3 + $0x58] sm:$0xff]
    %v172 = vld [vmem:[#allocation3 + $0x60] sm:$0xff]
    %v173 = vld [vmem:[#allocation3 + $0x68] sm:$0xff]
    %v174 = vld [vmem:[#allocation3 + $0x70] sm:$0xff]
    %v175 = vld [vmem:[#allocation3 + $0x78] sm:$0xff]
    %v176 = vld [vmem:[#allocation3 + $0x80] sm:$0xff]
    %v177 = vld [vmem:[#allocation3 + $0x88] sm:$0xff]
    %v178 = vld [vmem:[#allocation3 + $0x90] sm:$0xff]
    %v179 = vld [vmem:[#allocation3 + $0x98] sm:$0xff]
    %v180 = vld [vmem:[#allocation3 + $0xa0] sm:$0xff]
    %v181 = vld [vmem:[#allocation3 + $0xa8] sm:$0xff]
    %v182 = vld [vmem:[#allocation3 + $0xb0] sm:$0xff]
    %v183 = vld [vmem:[#allocation3 + $0xb8] sm:$0xff]
    %v184 = vld [vmem:[#allocation3 + $0xc0] sm:$0xff]
    %v185 = vld [vmem:[#allocation3 + $0xc8] sm:$0xff]
    %v186 = vld [vmem:[#allocation3 + $0xd0] sm:$0xff]
    %v187 = vld [vmem:[#allocation3 + $0xd8] sm:$0xff]
    %v188 = vld [vmem:[#allocation3 + $0xe0] sm:$0xff]
    %v189 = vld [vmem:[#allocation3 + $0xe8] sm:$0xff]
    %v190 = vld [vmem:[#allocation3 + $0xf0] sm:$0xff]
    %v191 = vld [vmem:[#allocation3 + $0xf8] sm:$0xff]
    %v192 = vld [vmem:[#allocation3 + $0x100] sm:$0xff]
    %v193 = vld [vmem:[#allocation3 + $0x108] sm:$0xff]
    %v194 = vld [vmem:[#allocation3 + $0x110] sm:$0xff]
    %v195 = vld [vmem:[#allocation3 + $0x118] sm:$0xff]
    %v196 = vld [vmem:[#allocation3 + $0x120] sm:$0xff]
    %v197 = vld [vmem:[#allocation3 + $0x128] sm:$0xff]
    %v198 = vld [vmem:[#allocation3 + $0x130] sm:$0xff]
    %v199 = vld [vmem:[#allocation3 + $0x138] sm:$0xff]
    %v200 = vld [vmem:[#allocation3 + $0x140] sm:$0xff]
    %v201 = vld [vmem:[#allocation3 + $0x148] sm:$0xff]
    %v202 = vld [vmem:[#allocation3 + $0x150] sm:$0xff]
    %v203 = vld [vmem:[#allocation3 + $0x158] sm:$0xff]
    %v204 = vld [vmem:[#allocation3 + $0x160] sm:$0xff]
    %v205 = vld [vmem:[#allocation3 + $0x168] sm:$0xff]
    %v206 = vld [vmem:[#allocation3 + $0x170] sm:$0xff]
    %v207 = vld [vmem:[#allocation3 + $0x178] sm:$0xff]
    %v208 = vld [vmem:[#allocation3 + $0x180] sm:$0xff]
    %v209 = vld [vmem:[#allocation3 + $0x188] sm:$0xff]
    %v210 = vld [vmem:[#allocation3 + $0x190] sm:$0xff]
    %v211 = vld [vmem:[#allocation3 + $0x198] sm:$0xff]
    %v212 = vld [vmem:[#allocation3 + $0x1a0] sm:$0xff]
    %v213 = vld [vmem:[#allocation3 + $0x1a8] sm:$0xff]
    %v214 = vld [vmem:[#allocation3 + $0x1b0] sm:$0xff]
    %v215 = vld [vmem:[#allocation3 + $0x1b8] sm:$0xff]
    %v216 = vld [vmem:[#allocation3 + $0x1c0] sm:$0xff]
    %v217 = vld [vmem:[#allocation3 + $0x1c8] sm:$0xff]
    %v218 = vld [vmem:[#allocation3 + $0x1d0] sm:$0xff]
    %v219 = vld [vmem:[#allocation3 + $0x1d8] sm:$0xff]
    %v220 = vld [vmem:[#allocation3 + $0x1e0] sm:$0xff]
    %v221 = vld [vmem:[#allocation3 + $0x1e8] sm:$0xff]
    %v222 = vld [vmem:[#allocation3 + $0x1f0] sm:$0xff]
    %v223 = vld [vmem:[#allocation3 + $0x1f8] sm:$0xff]
    %v224 = vld [vmem:[#allocation3 + $0x200] sm:$0xff]
    %v225 = vld [vmem:[#allocation3 + $0x208] sm:$0xff]
    %v226 = vld [vmem:[#allocation3 + $0x210] sm:$0xff]
    %v227 = vld [vmem:[#allocation3 + $0x218] sm:$0xff]
    %v228 = vld [vmem:[#allocation3 + $0x220] sm:$0xff]
    %v229 = vld [vmem:[#allocation3 + $0x228] sm:$0xff]
    %v230 = vld [vmem:[#allocation3 + $0x230] sm:$0xff]
    %v231 = vld [vmem:[#allocation3 + $0x238] sm:$0xff]
    %v232 = vld [vmem:[#allocation3 + $0x240] sm:$0xff]
    %v233 = vld [vmem:[#allocation3 + $0x248] sm:$0xff]
    %v234 = vld [vmem:[#allocation3 + $0x250] sm:$0xff]
    %v235 = vld [vmem:[#allocation3 + $0x258] sm:$0xff]
    %v236 = vld [vmem:[#allocation3 + $0x260] sm:$0xff]
    %v237 = vld [vmem:[#allocation3 + $0x268] sm:$0xff]
    %v238 = vld [vmem:[#allocation3 + $0x270] sm:$0xff]
    %v239 = vld [vmem:[#allocation3 + $0x278] sm:$0xff]
    %v240 = vld [vmem:[#allocation3 + $0x280] sm:$0xff]
    %v241 = vld [vmem:[#allocation3 + $0x288] sm:$0xff]
    %v242 = vld [vmem:[#allocation3 + $0x290] sm:$0xff]
    %v243 = vld [vmem:[#allocation3 + $0x298] sm:$0xff]
    %v244 = vld [vmem:[#allocation3 + $0x2a0] sm:$0xff]
    %v245 = vld [vmem:[#allocation3 + $0x2a8] sm:$0xff]
    %v246 = vld [vmem:[#allocation3 + $0x2b0] sm:$0xff]
    %v247 = vld [vmem:[#allocation3 + $0x2b8] sm:$0xff]
    %v248 = vld [vmem:[#allocation3 + $0x2c0] sm:$0xff]
    %v249 = vld [vmem:[#allocation3 + $0x2c8] sm:$0xff]
    %v250 = vld [vmem:[#allocation3 + $0x2d0] sm:$0xff]
    %v251 = vld [vmem:[#allocation3 + $0x2d8] sm:$0xff]
    %v252 = vld [vmem:[#allocation3 + $0x2e0] sm:$0xff]
    %v253 = vld [vmem:[#allocation3 + $0x2e8] sm:$0xff]
    %v254 = vld [vmem:[#allocation3 + $0x2f0] sm:$0xff]
    %v255 = vld [vmem:[#allocation3 + $0x2f8] sm:$0xff]
    %v256 = vld [vmem:[#allocation3 + $0x300] sm:$0xff]
    %v257 = vld [vmem:[#allocation3 + $0x308] sm:$0xff]
    %v258 = vld [vmem:[#allocation3 + $0x310] sm:$0xff]
    %v259 = vld [vmem:[#allocation3 + $0x318] sm:$0xff]
    %v260 = vld [vmem:[#allocation3 + $0x320] sm:$0xff]
    %v261 = vld [vmem:[#allocation3 + $0x328] sm:$0xff]
    %v262 = vld [vmem:[#allocation3 + $0x330] sm:$0xff]
    %v263 = vld [vmem:[#allocation3 + $0x338] sm:$0xff]
    %v264 = vld [vmem:[#allocation3 + $0x340] sm:$0xff]
    %v265 = vld [vmem:[#allocation3 + $0x348] sm:$0xff]
    %v266 = vld [vmem:[#allocation3 + $0x350] sm:$0xff]
    %v267 = vld [vmem:[#allocation3 + $0x358] sm:$0xff]
    %v268 = vld [vmem:[#allocation3 + $0x360] sm:$0xff]
    %v269 = vld [vmem:[#allocation3 + $0x368] sm:$0xff]
    %v270 = vld [vmem:[#allocation3 + $0x370] sm:$0xff]
    %v271 = vld [vmem:[#allocation3 + $0x378] sm:$0xff]
    %v272 = vld [vmem:[#allocation3 + $0x380] sm:$0xff]
    %v273 = vld [vmem:[#allocation3 + $0x388] sm:$0xff]
    %v274 = vld [vmem:[#allocation3 + $0x390] sm:$0xff]
    %v275 = vld [vmem:[#allocation3 + $0x398] sm:$0xff]
    %v276 = vld [vmem:[#allocation3 + $0x3a0] sm:$0xff]
    %v277 = vld [vmem:[#allocation3 + $0x3a8] sm:$0xff]
    %v278 = vld [vmem:[#allocation3 + $0x3b0] sm:$0xff]
    %v279 = vld [vmem:[#allocation3 + $0x3b8] sm:$0xff]
    %v280 = vld [vmem:[#allocation3 + $0x3c0] sm:$0xff]
    %v281 = vld [vmem:[#allocation3 + $0x3c8] sm:$0xff]
    %v282 = vld [vmem:[#allocation3 + $0x3d0] sm:$0xff]
    %v283 = vld [vmem:[#allocation3 + $0x3d8] sm:$0xff]
    %v284 = vld [vmem:[#allocation3 + $0x3e0] sm:$0xff]
    %v285 = vld [vmem:[#allocation3 + $0x3e8] sm:$0xff]
    %v286 = vld [vmem:[#allocation3 + $0x3f0] sm:$0xff]
    %v287 = vld [vmem:[#allocation3 + $0x3f8] sm:$0xff]
    %v288 = vld [vmem:[#allocation2] sm:$0xff]
    %v289 = vld [vmem:[#allocation2 + $0x8] sm:$0xff]
    %v290 = vld [vmem:[#allocation2 + $0x10] sm:$0xff]
    %v291 = vld [vmem:[#allocation2 + $0x18] sm:$0xff]
    %v292 = vld [vmem:[#allocation2 + $0x20] sm:$0xff]
    %v293 = vld [vmem:[#allocation2 + $0x28] sm:$0xff]
    %v294 = vld [vmem:[#allocation2 + $0x30] sm:$0xff]
    %v295 = vld [vmem:[#allocation2 + $0x38] sm:$0xff]
    %v296 = vld [vmem:[#allocation2 + $0x40] sm:$0xff]
    %v297 = vld [vmem:[#allocation2 + $0x48] sm:$0xff]
    %v298 = vld [vmem:[#allocation2 + $0x50] sm:$0xff]
    %v299 = vld [vmem:[#allocation2 + $0x58] sm:$0xff]
    %v300 = vld [vmem:[#allocation2 + $0x60] sm:$0xff]
    %v301 = vld [vmem:[#allocation2 + $0x68] sm:$0xff]
    %v302 = vld [vmem:[#allocation2 + $0x70] sm:$0xff]
    %v303 = vld [vmem:[#allocation2 + $0x78] sm:$0xff]
    %v304 = vld [vmem:[#allocation2 + $0x80] sm:$0xff]
    %v305 = vld [vmem:[#allocation2 + $0x88] sm:$0xff]
    %v306 = vld [vmem:[#allocation2 + $0x90] sm:$0xff]
    %v307 = vld [vmem:[#allocation2 + $0x98] sm:$0xff]
    %v308 = vld [vmem:[#allocation2 + $0xa0] sm:$0xff]
    %v309 = vld [vmem:[#allocation2 + $0xa8] sm:$0xff]
    %v310 = vld [vmem:[#allocation2 + $0xb0] sm:$0xff]
    %v311 = vld [vmem:[#allocation2 + $0xb8] sm:$0xff]
    %v312 = vld [vmem:[#allocation2 + $0xc0] sm:$0xff]
    %v313 = vld [vmem:[#allocation2 + $0xc8] sm:$0xff]
    %v314 = vld [vmem:[#allocation2 + $0xd0] sm:$0xff]
    %v315 = vld [vmem:[#allocation2 + $0xd8] sm:$0xff]
    %v316 = vld [vmem:[#allocation2 + $0xe0] sm:$0xff]
    %v317 = vld [vmem:[#allocation2 + $0xe8] sm:$0xff]
    %v318 = vld [vmem:[#allocation2 + $0xf0] sm:$0xff]
    %v319 = vld [vmem:[#allocation2 + $0xf8] sm:$0xff]
    %v320 = vld [vmem:[#allocation2 + $0x100] sm:$0xff]
    %v321 = vld [vmem:[#allocation2 + $0x108] sm:$0xff]
    %v322 = vld [vmem:[#allocation2 + $0x110] sm:$0xff]
    %v323 = vld [vmem:[#allocation2 + $0x118] sm:$0xff]
    %v324 = vld [vmem:[#allocation2 + $0x120] sm:$0xff]
    %v325 = vld [vmem:[#allocation2 + $0x128] sm:$0xff]
    %v326 = vld [vmem:[#allocation2 + $0x130] sm:$0xff]
    %v327 = vld [vmem:[#allocation2 + $0x138] sm:$0xff]
    %v328 = vld [vmem:[#allocation2 + $0x140] sm:$0xff]
    %v329 = vld [vmem:[#allocation2 + $0x148] sm:$0xff]
    %v330 = vld [vmem:[#allocation2 + $0x150] sm:$0xff]
    %v331 = vld [vmem:[#allocation2 + $0x158] sm:$0xff]
    %v332 = vld [vmem:[#allocation2 + $0x160] sm:$0xff]
    %v333 = vld [vmem:[#allocation2 + $0x168] sm:$0xff]
    %v334 = vld [vmem:[#allocation2 + $0x170] sm:$0xff]
    %v335 = vld [vmem:[#allocation2 + $0x178] sm:$0xff]
    %v336 = vld [vmem:[#allocation2 + $0x180] sm:$0xff]
    %v337 = vld [vmem:[#allocation2 + $0x188] sm:$0xff]
    %v338 = vld [vmem:[#allocation2 + $0x190] sm:$0xff]
    %v339 = vld [vmem:[#allocation2 + $0x198] sm:$0xff]
    %v340 = vld [vmem:[#allocation2 + $0x1a0] sm:$0xff]
    %v341 = vld [vmem:[#allocation2 + $0x1a8] sm:$0xff]
    %v342 = vld [vmem:[#allocation2 + $0x1b0] sm:$0xff]
    %v343 = vld [vmem:[#allocation2 + $0x1b8] sm:$0xff]
    %v344 = vld [vmem:[#allocation2 + $0x1c0] sm:$0xff]
    %v345 = vld [vmem:[#allocation2 + $0x1c8] sm:$0xff]
    %v346 = vld [vmem:[#allocation2 + $0x1d0] sm:$0xff]
    %v347 = vld [vmem:[#allocation2 + $0x1d8] sm:$0xff]
    %v348 = vld [vmem:[#allocation2 + $0x1e0] sm:$0xff]
    %v349 = vld [vmem:[#allocation2 + $0x1e8] sm:$0xff]
    %v350 = vld [vmem:[#allocation2 + $0x1f0] sm:$0xff]
    %v351 = vld [vmem:[#allocation2 + $0x1f8] sm:$0xff]
    %v352 = vld [vmem:[#allocation2 + $0x200] sm:$0xff]
    %v353 = vld [vmem:[#allocation2 + $0x208] sm:$0xff]
    %v354 = vld [vmem:[#allocation2 + $0x210] sm:$0xff]
    %v355 = vld [vmem:[#allocation2 + $0x218] sm:$0xff]
    %v356 = vld [vmem:[#allocation2 + $0x220] sm:$0xff]
    %v357 = vld [vmem:[#allocation2 + $0x228] sm:$0xff]
    %v358 = vld [vmem:[#allocation2 + $0x230] sm:$0xff]
    %v359 = vld [vmem:[#allocation2 + $0x238] sm:$0xff]
    %v360 = vld [vmem:[#allocation2 + $0x240] sm:$0xff]
    %v361 = vld [vmem:[#allocation2 + $0x248] sm:$0xff]
    %v362 = vld [vmem:[#allocation2 + $0x250] sm:$0xff]
    %v363 = vld [vmem:[#allocation2 + $0x258] sm:$0xff]
    %v364 = vld [vmem:[#allocation2 + $0x260] sm:$0xff]
    %v365 = vld [vmem:[#allocation2 + $0x268] sm:$0xff]
    %v366 = vld [vmem:[#allocation2 + $0x270] sm:$0xff]
    %v367 = vld [vmem:[#allocation2 + $0x278] sm:$0xff]
    %v368 = vld [vmem:[#allocation2 + $0x280] sm:$0xff]
    %v369 = vld [vmem:[#allocation2 + $0x288] sm:$0xff]
    %v370 = vld [vmem:[#allocation2 + $0x290] sm:$0xff]
    %v371 = vld [vmem:[#allocation2 + $0x298] sm:$0xff]
    %v372 = vld [vmem:[#allocation2 + $0x2a0] sm:$0xff]
    %v373 = vld [vmem:[#allocation2 + $0x2a8] sm:$0xff]
    %v374 = vld [vmem:[#allocation2 + $0x2b0] sm:$0xff]
    %v375 = vld [vmem:[#allocation2 + $0x2b8] sm:$0xff]
    %v376 = vld [vmem:[#allocation2 + $0x2c0] sm:$0xff]
    %v377 = vld [vmem:[#allocation2 + $0x2c8] sm:$0xff]
    %v378 = vld [vmem:[#allocation2 + $0x2d0] sm:$0xff]
    %v379 = vld [vmem:[#allocation2 + $0x2d8] sm:$0xff]
    %v380 = vld [vmem:[#allocation2 + $0x2e0] sm:$0xff]
    %v381 = vld [vmem:[#allocation2 + $0x2e8] sm:$0xff]
    %v382 = vld [vmem:[#allocation2 + $0x2f0] sm:$0xff]
    %v383 = vld [vmem:[#allocation2 + $0x2f8] sm:$0xff]
    %v384 = vld [vmem:[#allocation2 + $0x300] sm:$0xff]
    %v385 = vld [vmem:[#allocation2 + $0x308] sm:$0xff]
    %v386 = vld [vmem:[#allocation2 + $0x310] sm:$0xff]
    %v387 = vld [vmem:[#allocation2 + $0x318] sm:$0xff]
    %v388 = vld [vmem:[#allocation2 + $0x320] sm:$0xff]
    %v389 = vld [vmem:[#allocation2 + $0x328] sm:$0xff]
    %v390 = vld [vmem:[#allocation2 + $0x330] sm:$0xff]
    %v391 = vld [vmem:[#allocation2 + $0x338] sm:$0xff]
    %v392 = vld [vmem:[#allocation2 + $0x340] sm:$0xff]
    %v393 = vld [vmem:[#allocation2 + $0x348] sm:$0xff]
    %v394 = vld [vmem:[#allocation2 + $0x350] sm:$0xff]
    %v395 = vld [vmem:[#allocation2 + $0x358] sm:$0xff]
    %v396 = vld [vmem:[#allocation2 + $0x360] sm:$0xff]
    %v397 = vld [vmem:[#allocation2 + $0x368] sm:$0xff]
    %v398 = vld [vmem:[#allocation2 + $0x370] sm:$0xff]
    %v399 = vld [vmem:[#allocation2 + $0x378] sm:$0xff]
    %v400 = vld [vmem:[#allocation2 + $0x380] sm:$0xff]
    %v401 = vld [vmem:[#allocation2 + $0x388] sm:$0xff]
    %v402 = vld [vmem:[#allocation2 + $0x390] sm:$0xff]
    %v403 = vld [vmem:[#allocation2 + $0x398] sm:$0xff]
    %v404 = vld [vmem:[#allocation2 + $0x3a0] sm:$0xff]
    %v405 = vld [vmem:[#allocation2 + $0x3a8] sm:$0xff]
    %v406 = vld [vmem:[#allocation2 + $0x3b0] sm:$0xff]
    %v407 = vld [vmem:[#allocation2 + $0x3b8] sm:$0xff]
    %v408 = vld [vmem:[#allocation2 + $0x3c0] sm:$0xff]
    %v409 = vld [vmem:[#allocation2 + $0x3c8] sm:$0xff]
    %v410 = vld [vmem:[#allocation2 + $0x3d0] sm:$0xff]
    %v411 = vld [vmem:[#allocation2 + $0x3d8] sm:$0xff]
    %v412 = vld [vmem:[#allocation2 + $0x3e0] sm:$0xff]
    %v413 = vld [vmem:[#allocation2 + $0x3e8] sm:$0xff]
    %v414 = vld [vmem:[#allocation2 + $0x3f0] sm:$0xff]
    %v415 = vld [vmem:[#allocation2 + $0x3f8] sm:$0xff]
    %v416 = vld [vmem:[%s1] sm:$0xf]
    %v417 = vld [vmem:[%s1 + $0x4] sm:$0xf]
    %v418 = vld [vmem:[%s1 + $0x8] sm:$0xf]
    %v419 = vld [vmem:[%s1 + $0xc] sm:$0xf]
    %v420 = vld [vmem:[%s1 + $0x10] sm:$0xf]
    %v421 = vld [vmem:[%s1 + $0x14] sm:$0xf]
    %v422 = vld [vmem:[%s1 + $0x18] sm:$0xf]
    %v423 = vld [vmem:[%s1 + $0x1c] sm:$0xf]
    %v424 = vld [vmem:[%s1 + $0x20] sm:$0xf]
    %v425 = vld [vmem:[%s1 + $0x24] sm:$0xf]
    %v426 = vld [vmem:[%s1 + $0x28] sm:$0xf]
    %v427 = vld [vmem:[%s1 + $0x2c] sm:$0xf]
    %v428 = vld [vmem:[%s1 + $0x30] sm:$0xf]
    %v429 = vld [vmem:[%s1 + $0x34] sm:$0xf]
    %v430 = vld [vmem:[%s1 + $0x38] sm:$0xf]
    %v431 = vld [vmem:[%s1 + $0x3c] sm:$0xf]
    %v432 = vld [vmem:[%s1 + $0x40] sm:$0xf]
    %v433 = vld [vmem:[%s1 + $0x44] sm:$0xf]
    %v434 = vld [vmem:[%s1 + $0x48] sm:$0xf]
    %v435 = vld [vmem:[%s1 + $0x4c] sm:$0xf]
    %v436 = vld [vmem:[%s1 + $0x50] sm:$0xf]
    %v437 = vld [vmem:[%s1 + $0x54] sm:$0xf]
    %v438 = vld [vmem:[%s1 + $0x58] sm:$0xf]
    %v439 = vld [vmem:[%s1 + $0x5c] sm:$0xf]
    %v440 = vld [vmem:[%s1 + $0x60] sm:$0xf]
    %v441 = vld [vmem:[%s1 + $0x64] sm:$0xf]
    %v442 = vld [vmem:[%s1 + $0x68] sm:$0xf]
    %v443 = vld [vmem:[%s1 + $0x6c] sm:$0xf]
    %v444 = vld [vmem:[%s1 + $0x70] sm:$0xf]
    %v445 = vld [vmem:[%s1 + $0x74] sm:$0xf]
    %v446 = vld [vmem:[%s1 + $0x78] sm:$0xf]
    %v447 = vld [vmem:[%s1 + $0x7c] sm:$0xf]
    %v576 = vunpack.c.l.b16 %v160
    %v577 = vunpack.c.h.b16 %v160
    %v578 = vunpack.c.l.b16 %v161
    %v579 = vunpack.c.h.b16 %v161
    %v580 = vunpack.c.l.b16 %v162
    %v581 = vunpack.c.h.b16 %v162
    %v582 = vunpack.c.l.b16 %v163
    %v583 = vunpack.c.h.b16 %v163
    %v584 = vunpack.c.l.b16 %v164
    %v585 = vunpack.c.h.b16 %v164
    %v586 = vunpack.c.l.b16 %v165
    %v587 = vunpack.c.h.b16 %v165
    %v588 = vunpack.c.l.b16 %v166
    %v589 = vunpack.c.h.b16 %v166
    %v590 = vunpack.c.l.b16 %v167
    %v591 = vunpack.c.h.b16 %v167
    %v592 = vunpack.c.l.b16 %v168
    %v593 = vunpack.c.h.b16 %v168
    %v594 = vunpack.c.l.b16 %v169
    %v595 = vunpack.c.h.b16 %v169
    %v596 = vunpack.c.l.b16 %v170
    %v597 = vunpack.c.h.b16 %v170
    %v598 = vunpack.c.l.b16 %v171
    %v599 = vunpack.c.h.b16 %v171
    %v600 = vunpack.c.l.b16 %v172
    %v601 = vunpack.c.h.b16 %v172
    %v602 = vunpack.c.l.b16 %v173
    %v603 = vunpack.c.h.b16 %v173
    %v604 = vunpack.c.l.b16 %v174
    %v605 = vunpack.c.h.b16 %v174
    %v606 = vunpack.c.l.b16 %v175
    %v607 = vunpack.c.h.b16 %v175
    %v608 = vunpack.c.l.b16 %v176
    %v609 = vunpack.c.h.b16 %v176
    %v610 = vunpack.c.l.b16 %v177
    %v611 = vunpack.c.h.b16 %v177
    %v612 = vunpack.c.l.b16 %v178
    %v613 = vunpack.c.h.b16 %v178
    %v614 = vunpack.c.l.b16 %v179
    %v615 = vunpack.c.h.b16 %v179
    %v616 = vunpack.c.l.b16 %v180
    %v617 = vunpack.c.h.b16 %v180
    %v618 = vunpack.c.l.b16 %v181
    %v619 = vunpack.c.h.b16 %v181
    %v620 = vunpack.c.l.b16 %v182
    %v621 = vunpack.c.h.b16 %v182
    %v622 = vunpack.c.l.b16 %v183
    %v623 = vunpack.c.h.b16 %v183
    %v624 = vunpack.c.l.b16 %v184
    %v625 = vunpack.c.h.b16 %v184
    %v626 = vunpack.c.l.b16 %v185
    %v627 = vunpack.c.h.b16 %v185
    %v628 = vunpack.c.l.b16 %v186
    %v629 = vunpack.c.h.b16 %v186
    %v630 = vunpack.c.l.b16 %v187
    %v631 = vunpack.c.h.b16 %v187
    %v632 = vunpack.c.l.b16 %v188
    %v633 = vunpack.c.h.b16 %v188
    %v634 = vunpack.c.l.b16 %v189
    %v635 = vunpack.c.h.b16 %v189
    %v636 = vunpack.c.l.b16 %v190
    %v637 = vunpack.c.h.b16 %v190
    %v638 = vunpack.c.l.b16 %v191
    %v639 = vunpack.c.h.b16 %v191
    %v640 = vunpack.c.l.b16 %v192
    %v641 = vunpack.c.h.b16 %v192
    %v642 = vunpack.c.l.b16 %v193
    %v643 = vunpack.c.h.b16 %v193
    %v644 = vunpack.c.l.b16 %v194
    %v645 = vunpack.c.h.b16 %v194
    %v646 = vunpack.c.l.b16 %v195
    %v647 = vunpack.c.h.b16 %v195
    %v648 = vunpack.c.l.b16 %v196
    %v649 = vunpack.c.h.b16 %v196
    %v650 = vunpack.c.l.b16 %v197
    %v651 = vunpack.c.h.b16 %v197
    %v652 = vunpack.c.l.b16 %v198
    %v653 = vunpack.c.h.b16 %v198
    %v654 = vunpack.c.l.b16 %v199
    %v655 = vunpack.c.h.b16 %v199
    %v656 = vunpack.c.l.b16 %v200
    %v657 = vunpack.c.h.b16 %v200
    %v658 = vunpack.c.l.b16 %v201
    %v659 = vunpack.c.h.b16 %v201
    %v660 = vunpack.c.l.b16 %v202
    %v661 = vunpack.c.h.b16 %v202
    %v662 = vunpack.c.l.b16 %v203
    %v663 = vunpack.c.h.b16 %v203
    %v664 = vunpack.c.l.b16 %v204
    %v665 = vunpack.c.h.b16 %v204
    %v666 = vunpack.c.l.b16 %v205
    %v667 = vunpack.c.h.b16 %v205
    %v668 = vunpack.c.l.b16 %v206
    %v669 = vunpack.c.h.b16 %v206
    %v670 = vunpack.c.l.b16 %v207
    %v671 = vunpack.c.h.b16 %v207
    %v672 = vunpack.c.l.b16 %v208
    %v673 = vunpack.c.h.b16 %v208
    %v674 = vunpack.c.l.b16 %v209
    %v675 = vunpack.c.h.b16 %v209
    %v676 = vunpack.c.l.b16 %v210
    %v677 = vunpack.c.h.b16 %v210
    %v678 = vunpack.c.l.b16 %v211
    %v679 = vunpack.c.h.b16 %v211
    %v680 = vunpack.c.l.b16 %v212
    %v681 = vunpack.c.h.b16 %v212
    %v682 = vunpack.c.l.b16 %v213
    %v683 = vunpack.c.h.b16 %v213
    %v684 = vunpack.c.l.b16 %v214
    %v685 = vunpack.c.h.b16 %v214
    %v686 = vunpack.c.l.b16 %v215
    %v687 = vunpack.c.h.b16 %v215
    %v688 = vunpack.c.l.b16 %v216
    %v689 = vunpack.c.h.b16 %v216
    %v690 = vunpack.c.l.b16 %v217
    %v691 = vunpack.c.h.b16 %v217
    %v692 = vunpack.c.l.b16 %v218
    %v693 = vunpack.c.h.b16 %v218
    %v694 = vunpack.c.l.b16 %v219
    %v695 = vunpack.c.h.b16 %v219
    %v696 = vunpack.c.l.b16 %v220
    %v697 = vunpack.c.h.b16 %v220
    %v698 = vunpack.c.l.b16 %v221
    %v699 = vunpack.c.h.b16 %v221
    %v700 = vunpack.c.l.b16 %v222
    %v701 = vunpack.c.h.b16 %v222
    %v702 = vunpack.c.l.b16 %v223
    %v703 = vunpack.c.h.b16 %v223
    %v704 = vunpack.c.l.b16 %v224
    %v705 = vunpack.c.h.b16 %v224
    %v706 = vunpack.c.l.b16 %v225
    %v707 = vunpack.c.h.b16 %v225
    %v708 = vunpack.c.l.b16 %v226
    %v709 = vunpack.c.h.b16 %v226
    %v710 = vunpack.c.l.b16 %v227
    %v711 = vunpack.c.h.b16 %v227
    %v712 = vunpack.c.l.b16 %v228
    %v713 = vunpack.c.h.b16 %v228
    %v714 = vunpack.c.l.b16 %v229
    %v715 = vunpack.c.h.b16 %v229
    %v716 = vunpack.c.l.b16 %v230
    %v717 = vunpack.c.h.b16 %v230
    %v718 = vunpack.c.l.b16 %v231
    %v719 = vunpack.c.h.b16 %v231
    %v720 = vunpack.c.l.b16 %v232
    %v721 = vunpack.c.h.b16 %v232
    %v722 = vunpack.c.l.b16 %v233
    %v723 = vunpack.c.h.b16 %v233
    %v724 = vunpack.c.l.b16 %v234
    %v725 = vunpack.c.h.b16 %v234
    %v726 = vunpack.c.l.b16 %v235
    %v727 = vunpack.c.h.b16 %v235
    %v728 = vunpack.c.l.b16 %v236
    %v729 = vunpack.c.h.b16 %v236
    %v730 = vunpack.c.l.b16 %v237
    %v731 = vunpack.c.h.b16 %v237
    %v732 = vunpack.c.l.b16 %v238
    %v733 = vunpack.c.h.b16 %v238
    %v734 = vunpack.c.l.b16 %v239
    %v735 = vunpack.c.h.b16 %v239
    %v736 = vunpack.c.l.b16 %v240
    %v737 = vunpack.c.h.b16 %v240
    %v738 = vunpack.c.l.b16 %v241
    %v739 = vunpack.c.h.b16 %v241
    %v740 = vunpack.c.l.b16 %v242
    %v741 = vunpack.c.h.b16 %v242
    %v742 = vunpack.c.l.b16 %v243
    %v743 = vunpack.c.h.b16 %v243
    %v744 = vunpack.c.l.b16 %v244
    %v745 = vunpack.c.h.b16 %v244
    %v746 = vunpack.c.l.b16 %v245
    %v747 = vunpack.c.h.b16 %v245
    %v748 = vunpack.c.l.b16 %v246
    %v749 = vunpack.c.h.b16 %v246
    %v750 = vunpack.c.l.b16 %v247
    %v751 = vunpack.c.h.b16 %v247
    %v752 = vunpack.c.l.b16 %v248
    %v753 = vunpack.c.h.b16 %v248
    %v754 = vunpack.c.l.b16 %v249
    %v755 = vunpack.c.h.b16 %v249
    %v756 = vunpack.c.l.b16 %v250
    %v757 = vunpack.c.h.b16 %v250
    %v758 = vunpack.c.l.b16 %v251
    %v759 = vunpack.c.h.b16 %v251
    %v760 = vunpack.c.l.b16 %v252
    %v761 = vunpack.c.h.b16 %v252
    %v762 = vunpack.c.l.b16 %v253
    %v763 = vunpack.c.h.b16 %v253
    %v764 = vunpack.c.l.b16 %v254
    %v765 = vunpack.c.h.b16 %v254
    %v766 = vunpack.c.l.b16 %v255
    %v767 = vunpack.c.h.b16 %v255
    %v768 = vunpack.c.l.b16 %v256
    %v769 = vunpack.c.h.b16 %v256
    %v770 = vunpack.c.l.b16 %v257
    %v771 = vunpack.c.h.b16 %v257
    %v772 = vunpack.c.l.b16 %v258
    %v773 = vunpack.c.h.b16 %v258
    %v774 = vunpack.c.l.b16 %v259
    %v775 = vunpack.c.h.b16 %v259
    %v776 = vunpack.c.l.b16 %v260
    %v777 = vunpack.c.h.b16 %v260
    %v778 = vunpack.c.l.b16 %v261
    %v779 = vunpack.c.h.b16 %v261
    %v780 = vunpack.c.l.b16 %v262
    %v781 = vunpack.c.h.b16 %v262
    %v782 = vunpack.c.l.b16 %v263
    %v783 = vunpack.c.h.b16 %v263
    %v784 = vunpack.c.l.b16 %v264
    %v785 = vunpack.c.h.b16 %v264
    %v786 = vunpack.c.l.b16 %v265
    %v787 = vunpack.c.h.b16 %v265
    %v788 = vunpack.c.l.b16 %v266
    %v789 = vunpack.c.h.b16 %v266
    %v790 = vunpack.c.l.b16 %v267
    %v791 = vunpack.c.h.b16 %v267
    %v792 = vunpack.c.l.b16 %v268
    %v793 = vunpack.c.h.b16 %v268
    %v794 = vunpack.c.l.b16 %v269
    %v795 = vunpack.c.h.b16 %v269
    %v796 = vunpack.c.l.b16 %v270
    %v797 = vunpack.c.h.b16 %v270
    %v798 = vunpack.c.l.b16 %v271
    %v799 = vunpack.c.h.b16 %v271
    %v800 = vunpack.c.l.b16 %v272
    %v801 = vunpack.c.h.b16 %v272
    %v802 = vunpack.c.l.b16 %v273
    %v803 = vunpack.c.h.b16 %v273
    %v804 = vunpack.c.l.b16 %v274
    %v805 = vunpack.c.h.b16 %v274
    %v806 = vunpack.c.l.b16 %v275
    %v807 = vunpack.c.h.b16 %v275
    %v808 = vunpack.c.l.b16 %v276
    %v809 = vunpack.c.h.b16 %v276
    %v810 = vunpack.c.l.b16 %v277
    %v811 = vunpack.c.h.b16 %v277
    %v812 = vunpack.c.l.b16 %v278
    %v813 = vunpack.c.h.b16 %v278
    %v814 = vunpack.c.l.b16 %v279
    %v815 = vunpack.c.h.b16 %v279
    %v816 = vunpack.c.l.b16 %v280
    %v817 = vunpack.c.h.b16 %v280
    %v818 = vunpack.c.l.b16 %v281
    %v819 = vunpack.c.h.b16 %v281
    %v820 = vunpack.c.l.b16 %v282
    %v821 = vunpack.c.h.b16 %v282
    %v822 = vunpack.c.l.b16 %v283
    %v823 = vunpack.c.h.b16 %v283
    %v824 = vunpack.c.l.b16 %v284
    %v825 = vunpack.c.h.b16 %v284
    %v826 = vunpack.c.l.b16 %v285
    %v827 = vunpack.c.h.b16 %v285
    %v828 = vunpack.c.l.b16 %v286
    %v829 = vunpack.c.h.b16 %v286
    %v830 = vunpack.c.l.b16 %v287
    %v831 = vunpack.c.h.b16 %v287
    %v832 = vpack.c.b16 %v578, %v576
    %v833 = vpack.c.b16 %v579, %v577
    %v834 = vpack.c.b16 %v582, %v580
    %v835 = vpack.c.b16 %v583, %v581
    %v836 = vpack.c.b16 %v586, %v584
    %v837 = vpack.c.b16 %v587, %v585
    %v838 = vpack.c.b16 %v590, %v588
    %v839 = vpack.c.b16 %v591, %v589
    %v840 = vpack.c.b16 %v594, %v592
    %v841 = vpack.c.b16 %v595, %v593
    %v842 = vpack.c.b16 %v598, %v596
    %v843 = vpack.c.b16 %v599, %v597
    %v844 = vpack.c.b16 %v602, %v600
    %v845 = vpack.c.b16 %v603, %v601
    %v846 = vpack.c.b16 %v606, %v604
    %v847 = vpack.c.b16 %v607, %v605
    %v848 = vpack.c.b16 %v610, %v608
    %v849 = vpack.c.b16 %v611, %v609
    %v850 = vpack.c.b16 %v614, %v612
    %v851 = vpack.c.b16 %v615, %v613
    %v852 = vpack.c.b16 %v618, %v616
    %v853 = vpack.c.b16 %v619, %v617
    %v854 = vpack.c.b16 %v622, %v620
    %v855 = vpack.c.b16 %v623, %v621
    %v856 = vpack.c.b16 %v626, %v624
    %v857 = vpack.c.b16 %v627, %v625
    %v858 = vpack.c.b16 %v630, %v628
    %v859 = vpack.c.b16 %v631, %v629
    %v860 = vpack.c.b16 %v634, %v632
    %v861 = vpack.c.b16 %v635, %v633
    %v862 = vpack.c.b16 %v638, %v636
    %v863 = vpack.c.b16 %v639, %v637
    %v864 = vpack.c.b16 %v642, %v640
    %v865 = vpack.c.b16 %v643, %v641
    %v866 = vpack.c.b16 %v646, %v644
    %v867 = vpack.c.b16 %v647, %v645
    %v868 = vpack.c.b16 %v650, %v648
    %v869 = vpack.c.b16 %v651, %v649
    %v870 = vpack.c.b16 %v654, %v652
    %v871 = vpack.c.b16 %v655, %v653
    %v872 = vpack.c.b16 %v658, %v656
    %v873 = vpack.c.b16 %v659, %v657
    %v874 = vpack.c.b16 %v662, %v660
    %v875 = vpack.c.b16 %v663, %v661
    %v876 = vpack.c.b16 %v666, %v664
    %v877 = vpack.c.b16 %v667, %v665
    %v878 = vpack.c.b16 %v670, %v668
    %v879 = vpack.c.b16 %v671, %v669
    %v880 = vpack.c.b16 %v674, %v672
    %v881 = vpack.c.b16 %v675, %v673
    %v882 = vpack.c.b16 %v678, %v676
    %v883 = vpack.c.b16 %v679, %v677
    %v884 = vpack.c.b16 %v682, %v680
    %v885 = vpack.c.b16 %v683, %v681
    %v886 = vpack.c.b16 %v686, %v684
    %v887 = vpack.c.b16 %v687, %v685
    %v888 = vpack.c.b16 %v690, %v688
    %v889 = vpack.c.b16 %v691, %v689
    %v890 = vpack.c.b16 %v694, %v692
    %v891 = vpack.c.b16 %v695, %v693
    %v892 = vpack.c.b16 %v698, %v696
    %v893 = vpack.c.b16 %v699, %v697
    %v894 = vpack.c.b16 %v702, %v700
    %v895 = vpack.c.b16 %v703, %v701
    %v896 = vpack.c.b16 %v706, %v704
    %v897 = vpack.c.b16 %v707, %v705
    %v898 = vpack.c.b16 %v710, %v708
    %v899 = vpack.c.b16 %v711, %v709
    %v900 = vpack.c.b16 %v714, %v712
    %v901 = vpack.c.b16 %v715, %v713
    %v902 = vpack.c.b16 %v718, %v716
    %v903 = vpack.c.b16 %v719, %v717
    %v904 = vpack.c.b16 %v722, %v720
    %v905 = vpack.c.b16 %v723, %v721
    %v906 = vpack.c.b16 %v726, %v724
    %v907 = vpack.c.b16 %v727, %v725
    %v908 = vpack.c.b16 %v730, %v728
    %v909 = vpack.c.b16 %v731, %v729
    %v910 = vpack.c.b16 %v734, %v732
    %v911 = vpack.c.b16 %v735, %v733
    %v912 = vpack.c.b16 %v738, %v736
    %v913 = vpack.c.b16 %v739, %v737
    %v914 = vpack.c.b16 %v742, %v740
    %v915 = vpack.c.b16 %v743, %v741
    %v916 = vpack.c.b16 %v746, %v744
    %v917 = vpack.c.b16 %v747, %v745
    %v918 = vpack.c.b16 %v750, %v748
    %v919 = vpack.c.b16 %v751, %v749
    %v920 = vpack.c.b16 %v754, %v752
    %v921 = vpack.c.b16 %v755, %v753
    %v922 = vpack.c.b16 %v758, %v756
    %v923 = vpack.c.b16 %v759, %v757
    %v924 = vpack.c.b16 %v762, %v760
    %v925 = vpack.c.b16 %v763, %v761
    %v926 = vpack.c.b16 %v766, %v764
    %v927 = vpack.c.b16 %v767, %v765
    %v928 = vpack.c.b16 %v770, %v768
    %v929 = vpack.c.b16 %v771, %v769
    %v930 = vpack.c.b16 %v774, %v772
    %v931 = vpack.c.b16 %v775, %v773
    %v932 = vpack.c.b16 %v778, %v776
    %v933 = vpack.c.b16 %v779, %v777
    %v934 = vpack.c.b16 %v782, %v780
    %v935 = vpack.c.b16 %v783, %v781
    %v936 = vpack.c.b16 %v786, %v784
    %v937 = vpack.c.b16 %v787, %v785
    %v938 = vpack.c.b16 %v790, %v788
    %v939 = vpack.c.b16 %v791, %v789
    %v940 = vpack.c.b16 %v794, %v792
    %v941 = vpack.c.b16 %v795, %v793
    %v942 = vpack.c.b16 %v798, %v796
    %v943 = vpack.c.b16 %v799, %v797
    %v944 = vpack.c.b16 %v802, %v800
    %v945 = vpack.c.b16 %v803, %v801
    %v946 = vpack.c.b16 %v806, %v804
    %v947 = vpack.c.b16 %v807, %v805
    %v948 = vpack.c.b16 %v810, %v808
    %v949 = vpack.c.b16 %v811, %v809
    %v950 = vpack.c.b16 %v814, %v812
    %v951 = vpack.c.b16 %v815, %v813
    %v952 = vpack.c.b16 %v818, %v816
    %v953 = vpack.c.b16 %v819, %v817
    %v954 = vpack.c.b16 %v822, %v820
    %v955 = vpack.c.b16 %v823, %v821
    %v956 = vpack.c.b16 %v826, %v824
    %v957 = vpack.c.b16 %v827, %v825
    %v958 = vpack.c.b16 %v830, %v828
    %v959 = vpack.c.b16 %v831, %v829
    %v1120 = vunpack.c.l.b16 %v416
    %v1121 = vunpack.c.l.b16 %v417
    %v1122 = vunpack.c.l.b16 %v418
    %v1123 = vunpack.c.l.b16 %v419
    %v1124 = vunpack.c.l.b16 %v420
    %v1125 = vunpack.c.l.b16 %v421
    %v1126 = vunpack.c.l.b16 %v422
    %v1127 = vunpack.c.l.b16 %v423
    %v1128 = vunpack.c.l.b16 %v424
    %v1129 = vunpack.c.l.b16 %v425
    %v1130 = vunpack.c.l.b16 %v426
    %v1131 = vunpack.c.l.b16 %v427
    %v1132 = vunpack.c.l.b16 %v428
    %v1133 = vunpack.c.l.b16 %v429
    %v1134 = vunpack.c.l.b16 %v430
    %v1135 = vunpack.c.l.b16 %v431
    %v1136 = vunpack.c.l.b16 %v432
    %v1137 = vunpack.c.l.b16 %v433
    %v1138 = vunpack.c.l.b16 %v434
    %v1139 = vunpack.c.l.b16 %v435
    %v1140 = vunpack.c.l.b16 %v436
    %v1141 = vunpack.c.l.b16 %v437
    %v1142 = vunpack.c.l.b16 %v438
    %v1143 = vunpack.c.l.b16 %v439
    %v1144 = vunpack.c.l.b16 %v440
    %v1145 = vunpack.c.l.b16 %v441
    %v1146 = vunpack.c.l.b16 %v442
    %v1147 = vunpack.c.l.b16 %v443
    %v1148 = vunpack.c.l.b16 %v444
    %v1149 = vunpack.c.l.b16 %v445
    %v1150 = vunpack.c.l.b16 %v446
    %v1151 = vunpack.c.l.b16 %v447
    %v1152 = vpack.c.b16 %v1121, %v1120
    %v1153 = vpack.c.b16 %v1123, %v1122
    %v1154 = vpack.c.b16 %v1125, %v1124
    %v1155 = vpack.c.b16 %v1127, %v1126
    %v1156 = vpack.c.b16 %v1129, %v1128
    %v1157 = vpack.c.b16 %v1131, %v1130
    %v1158 = vpack.c.b16 %v1133, %v1132
    %v1159 = vpack.c.b16 %v1135, %v1134
    %v1160 = vpack.c.b16 %v1137, %v1136
    %v1161 = vpack.c.b16 %v1139, %v1138
    %v1162 = vpack.c.b16 %v1141, %v1140
    %v1163 = vpack.c.b16 %v1143, %v1142
    %v1164 = vpack.c.b16 %v1145, %v1144
    %v1165 = vpack.c.b16 %v1147, %v1146
    %v1166 = vpack.c.b16 %v1149, %v1148
    %v1167 = vpack.c.b16 %v1151, %v1150
    %1184 = vmatprep.subr.bf16.mxu0 0
    %1185 = vmatpush1.bf16.msra.mxu0 %v1152
    %1186 = vmatprep.subr.bf16.mxu0 0
    %1187 = vmatpush1.bf16.msra.mxu0 %v1153
    %1188 = vmatprep.subr.bf16.mxu0 0
    %1189 = vmatpush1.bf16.msra.mxu0 %v1154
    %1190 = vmatprep.subr.bf16.mxu0 0
    %1191 = vmatpush1.bf16.msra.mxu0 %v1155
    %1192 = vmatprep.subr.bf16.mxu0 0
    %1193 = vmatpush1.bf16.msra.mxu0 %v1156
    %1194 = vmatprep.subr.bf16.mxu0 0
    %1195 = vmatpush1.bf16.msra.mxu0 %v1157
    %1196 = vmatprep.subr.bf16.mxu0 0
    %1197 = vmatpush1.bf16.msra.mxu0 %v1158
    %1198 = vmatprep.subr.bf16.mxu0 0
    %1199 = vmatpush1.bf16.msra.mxu0 %v1159
    %1200 = vmatprep.subr.bf16.mxu0 0
    %1201 = vmatpush1.bf16.msra.mxu0 %v1160
    %1202 = vmatprep.subr.bf16.mxu0 0
    %1203 = vmatpush1.bf16.msra.mxu0 %v1161
    %1204 = vmatprep.subr.bf16.mxu0 0
    %1205 = vmatpush1.bf16.msra.mxu0 %v1162
    %1206 = vmatprep.subr.bf16.mxu0 0
    %1207 = vmatpush1.bf16.msra.mxu0 %v1163
    %1208 = vmatprep.subr.bf16.mxu0 0
    %1209 = vmatpush1.bf16.msra.mxu0 %v1164
    %1210 = vmatprep.subr.bf16.mxu0 0
    %1211 = vmatpush1.bf16.msra.mxu0 %v1165
    %1212 = vmatprep.subr.bf16.mxu0 0
    %1213 = vmatpush1.bf16.msra.mxu0 %v1166
    %1214 = vmatprep.subr.bf16.mxu0 0
    %1215 = vmatpush1.bf16.msra.mxu0 %v1167
    %1216 = vmatprep.mubr.bf16.mxu0 %v833
    %1217 = vmatmul.mubr.bf16.gmra.mrb[0].mxu0 %v832
    %v1218 = vpop.f32.mrb[0].mxu0
    %v1219 = vadd.f32 0.0, %v1218
    %v1220 = vpop.f32.mrb[0].mxu0
    %v1221 = vpop.f32.mrb[0].mxu0
    %v1222 = vadd.f32 0.0, %v1221
    %v1223 = vpop.f32.mrb[0].mxu0
    %1224 = vmatprep.mubr.bf16.mxu0 %v835
    %1225 = vmatmul.mubr.bf16.gmra.mrb[0].mxu0 %v834
    %v1226 = vpop.f32.mrb[0].mxu0
    %v1227 = vadd.f32 0.0, %v1226
    %v1228 = vpop.f32.mrb[0].mxu0
    %v1229 = vpop.f32.mrb[0].mxu0
    %v1230 = vadd.f32 0.0, %v1229
    %v1231 = vpop.f32.mrb[0].mxu0
    %1232 = vmatprep.mubr.bf16.mxu0 %v837
    %1233 = vmatmul.mubr.bf16.gmra.mrb[0].mxu0 %v836
    %v1234 = vpop.f32.mrb[0].mxu0
    %v1235 = vadd.f32 0.0, %v1234
    %v1236 = vpop.f32.mrb[0].mxu0
    %v1237 = vpop.f32.mrb[0].mxu0
    %v1238 = vadd.f32 0.0, %v1237
    %v1239 = vpop.f32.mrb[0].mxu0
    %1240 = vmatprep.mubr.bf16.mxu0 %v839
    %1241 = vmatmul.mubr.bf16.gmra.mrb[0].mxu0 %v838
    %v1242 = vpop.f32.mrb[0].mxu0
    %v1243 = vadd.f32 0.0, %v1242
    %v1244 = vpop.f32.mrb[0].mxu0
    %v1245 = vpop.f32.mrb[0].mxu0
    %v1246 = vadd.f32 0.0, %v1245
    %v1247 = vpop.f32.mrb[0].mxu0
    %1248 = vmatprep.mubr.bf16.mxu0 %v841
    %1249 = vmatmul.mubr.bf16.gmra.mrb[0].mxu0 %v840
    %v1250 = vpop.f32.mrb[0].mxu0
    %v1251 = vadd.f32 0.0, %v1250
    %v1252 = vpop.f32.mrb[0].mxu0
    %v1253 = vpop.f32.mrb[0].mxu0
    %v1254 = vadd.f32 0.0, %v1253
    %v1255 = vpop.f32.mrb[0].mxu0
    %1256 = vmatprep.mubr.bf16.mxu0 %v843
    %1257 = vmatmul.mubr.bf16.gmra.mrb[0].mxu0 %v842
    %v1258 = vpop.f32.mrb[0].mxu0
    %v1259 = vadd.f32 0.0, %v1258
    %v1260 = vpop.f32.mrb[0].mxu0
    %v1261 = vpop.f32.mrb[0].mxu0
    %v1262 = vadd.f32 0.0, %v1261
    %v1263 = vpop.f32.mrb[0].mxu0
    %1264 = vmatprep.mubr.bf16.mxu0 %v845
    %1265 = vmatmul.mubr.bf16.gmra.mrb[0].mxu0 %v844
    %v1266 = vpop.f32.mrb[0].mxu0
    %v1267 = vadd.f32 0.0, %v1266
    %v1268 = vpop.f32.mrb[0].mxu0
    %v1269 = vpop.f32.mrb[0].mxu0
    %v1270 = vadd.f32 0.0, %v1269
    %v1271 = vpop.f32.mrb[0].mxu0
    %1272 = vmatprep.mubr.bf16.mxu0 %v847
    %1273 = vmatmul.mubr.bf16.gmra.mrb[0].mxu0 %v846
    %v1274 = vpop.f32.mrb[0].mxu0
    %v1275 = vadd.f32 0.0, %v1274
    %v1276 = vpop.f32.mrb[0].mxu0
    %v1277 = vpop.f32.mrb[0].mxu0
    %v1278 = vadd.f32 0.0, %v1277
    %v1279 = vpop.f32.mrb[0].mxu0
    %1280 = vmatprep.mubr.bf16.mxu0 %v849
    %1281 = vmatmul.mubr.bf16.gmra.mrb[0].mxu0 %v848
    %v1282 = vpop.f32.mrb[0].mxu0
    %v1283 = vadd.f32 0.0, %v1282
    %v1284 = vpop.f32.mrb[0].mxu0
    %v1285 = vpop.f32.mrb[0].mxu0
    %v1286 = vadd.f32 0.0, %v1285
    %v1287 = vpop.f32.mrb[0].mxu0
    %1288 = vmatprep.mubr.bf16.mxu0 %v851
    %1289 = vmatmul.mubr.bf16.gmra.mrb[0].mxu0 %v850
    %v1290 = vpop.f32.mrb[0].mxu0
    %v1291 = vadd.f32 0.0, %v1290
    %v1292 = vpop.f32.mrb[0].mxu0
    %v1293 = vpop.f32.mrb[0].mxu0
    %v1294 = vadd.f32 0.0, %v1293
    %v1295 = vpop.f32.mrb[0].mxu0
    %1296 = vmatprep.mubr.bf16.mxu0 %v853
    %1297 = vmatmul.mubr.bf16.gmra.mrb[0].mxu0 %v852
    %v1298 = vpop.f32.mrb[0].mxu0
    %v1299 = vadd.f32 0.0, %v1298
    %v1300 = vpop.f32.mrb[0].mxu0
    %v1301 = vpop.f32.mrb[0].mxu0
    %v1302 = vadd.f32 0.0, %v1301
    %v1303 = vpop.f32.mrb[0].mxu0
    %1304 = vmatprep.mubr.bf16.mxu0 %v855
    %1305 = vmatmul.mubr.bf16.gmra.mrb[0].mxu0 %v854
    %v1306 = vpop.f32.mrb[0].mxu0
    %v1307 = vadd.f32 0.0, %v1306
    %v1308 = vpop.f32.mrb[0].mxu0
    %v1309 = vpop.f32.mrb[0].mxu0
    %v1310 = vadd.f32 0.0, %v1309
    %v1311 = vpop.f32.mrb[0].mxu0
    %1312 = vmatprep.mubr.bf16.mxu0 %v857
    %1313 = vmatmul.mubr.bf16.gmra.mrb[0].mxu0 %v856
    %v1314 = vpop.f32.mrb[0].mxu0
    %v1315 = vadd.f32 0.0, %v1314
    %v1316 = vpop.f32.mrb[0].mxu0
    %v1317 = vpop.f32.mrb[0].mxu0
    %v1318 = vadd.f32 0.0, %v1317
    %v1319 = vpop.f32.mrb[0].mxu0
    %1320 = vmatprep.mubr.bf16.mxu0 %v859
    %1321 = vmatmul.mubr.bf16.gmra.mrb[0].mxu0 %v858
    %v1322 = vpop.f32.mrb[0].mxu0
    %v1323 = vadd.f32 0.0, %v1322
    %v1324 = vpop.f32.mrb[0].mxu0
    %v1325 = vpop.f32.mrb[0].mxu0
    %v1326 = vadd.f32 0.0, %v1325
    %v1327 = vpop.f32.mrb[0].mxu0
    %1328 = vmatprep.mubr.bf16.mxu0 %v861
    %1329 = vmatmul.mubr.bf16.gmra.mrb[0].mxu0 %v860
    %v1330 = vpop.f32.mrb[0].mxu0
    %v1331 = vadd.f32 0.0, %v1330
    %v1332 = vpop.f32.mrb[0].mxu0
    %v1333 = vpop.f32.mrb[0].mxu0
    %v1334 = vadd.f32 0.0, %v1333
    %v1335 = vpop.f32.mrb[0].mxu0
    %1336 = vmatprep.mubr.bf16.mxu0 %v863
    %1337 = vmatmul.mubr.bf16.gmra.mrb[0].mxu0 %v862
    %v1338 = vpop.f32.mrb[0].mxu0
    %v1339 = vadd.f32 0.0, %v1338
    %v1340 = vpop.f32.mrb[0].mxu0
    %v1341 = vpop.f32.mrb[0].mxu0
    %v1342 = vadd.f32 0.0, %v1341
    %v1343 = vpop.f32.mrb[0].mxu0
    %1344 = vmatprep.mubr.bf16.mxu0 %v865
    %1345 = vmatmul.mubr.bf16.gmra.mrb[0].mxu0 %v864
    %v1346 = vpop.f32.mrb[0].mxu0
    %v1347 = vadd.f32 0.0, %v1346
    %v1348 = vpop.f32.mrb[0].mxu0
    %v1349 = vpop.f32.mrb[0].mxu0
    %v1350 = vadd.f32 0.0, %v1349
    %v1351 = vpop.f32.mrb[0].mxu0
    %1352 = vmatprep.mubr.bf16.mxu0 %v867
    %1353 = vmatmul.mubr.bf16.gmra.mrb[0].mxu0 %v866
    %v1354 = vpop.f32.mrb[0].mxu0
    %v1355 = vadd.f32 0.0, %v1354
    %v1356 = vpop.f32.mrb[0].mxu0
    %v1357 = vpop.f32.mrb[0].mxu0
    %v1358 = vadd.f32 0.0, %v1357
    %v1359 = vpop.f32.mrb[0].mxu0
    %1360 = vmatprep.mubr.bf16.mxu0 %v869
    %1361 = vmatmul.mubr.bf16.gmra.mrb[0].mxu0 %v868
    %v1362 = vpop.f32.mrb[0].mxu0
    %v1363 = vadd.f32 0.0, %v1362
    %v1364 = vpop.f32.mrb[0].mxu0
    %v1365 = vpop.f32.mrb[0].mxu0
    %v1366 = vadd.f32 0.0, %v1365
    %v1367 = vpop.f32.mrb[0].mxu0
    %1368 = vmatprep.mubr.bf16.mxu0 %v871
    %1369 = vmatmul.mubr.bf16.gmra.mrb[0].mxu0 %v870
    %v1370 = vpop.f32.mrb[0].mxu0
    %v1371 = vadd.f32 0.0, %v1370
    %v1372 = vpop.f32.mrb[0].mxu0
    %v1373 = vpop.f32.mrb[0].mxu0
    %v1374 = vadd.f32 0.0, %v1373
    %v1375 = vpop.f32.mrb[0].mxu0
    %1376 = vmatprep.mubr.bf16.mxu0 %v873
    %1377 = vmatmul.mubr.bf16.gmra.mrb[0].mxu0 %v872
    %v1378 = vpop.f32.mrb[0].mxu0
    %v1379 = vadd.f32 0.0, %v1378
    %v1380 = vpop.f32.mrb[0].mxu0
    %v1381 = vpop.f32.mrb[0].mxu0
    %v1382 = vadd.f32 0.0, %v1381
    %v1383 = vpop.f32.mrb[0].mxu0
    %1384 = vmatprep.mubr.bf16.mxu0 %v875
    %1385 = vmatmul.mubr.bf16.gmra.mrb[0].mxu0 %v874
    %v1386 = vpop.f32.mrb[0].mxu0
    %v1387 = vadd.f32 0.0, %v1386
    %v1388 = vpop.f32.mrb[0].mxu0
    %v1389 = vpop.f32.mrb[0].mxu0
    %v1390 = vadd.f32 0.0, %v1389
    %v1391 = vpop.f32.mrb[0].mxu0
    %1392 = vmatprep.mubr.bf16.mxu0 %v877
    %1393 = vmatmul.mubr.bf16.gmra.mrb[0].mxu0 %v876
    %v1394 = vpop.f32.mrb[0].mxu0
    %v1395 = vadd.f32 0.0, %v1394
    %v1396 = vpop.f32.mrb[0].mxu0
    %v1397 = vpop.f32.mrb[0].mxu0
    %v1398 = vadd.f32 0.0, %v1397
    %v1399 = vpop.f32.mrb[0].mxu0
    %1400 = vmatprep.mubr.bf16.mxu0 %v879
    %1401 = vmatmul.mubr.bf16.gmra.mrb[0].mxu0 %v878
    %v1402 = vpop.f32.mrb[0].mxu0
    %v1403 = vadd.f32 0.0, %v1402
    %v1404 = vpop.f32.mrb[0].mxu0
    %v1405 = vpop.f32.mrb[0].mxu0
    %v1406 = vadd.f32 0.0, %v1405
    %v1407 = vpop.f32.mrb[0].mxu0
    %1408 = vmatprep.mubr.bf16.mxu0 %v881
    %1409 = vmatmul.mubr.bf16.gmra.mrb[0].mxu0 %v880
    %v1410 = vpop.f32.mrb[0].mxu0
    %v1411 = vadd.f32 0.0, %v1410
    %v1412 = vpop.f32.mrb[0].mxu0
    %v1413 = vpop.f32.mrb[0].mxu0
    %v1414 = vadd.f32 0.0, %v1413
    %v1415 = vpop.f32.mrb[0].mxu0
    %1416 = vmatprep.mubr.bf16.mxu0 %v883
    %1417 = vmatmul.mubr.bf16.gmra.mrb[0].mxu0 %v882
    %v1418 = vpop.f32.mrb[0].mxu0
    %v1419 = vadd.f32 0.0, %v1418
    %v1420 = vpop.f32.mrb[0].mxu0
    %v1421 = vpop.f32.mrb[0].mxu0
    %v1422 = vadd.f32 0.0, %v1421
    %v1423 = vpop.f32.mrb[0].mxu0
    %1424 = vmatprep.mubr.bf16.mxu0 %v885
    %1425 = vmatmul.mubr.bf16.gmra.mrb[0].mxu0 %v884
    %v1426 = vpop.f32.mrb[0].mxu0
    %v1427 = vadd.f32 0.0, %v1426
    %v1428 = vpop.f32.mrb[0].mxu0
    %v1429 = vpop.f32.mrb[0].mxu0
    %v1430 = vadd.f32 0.0, %v1429
    %v1431 = vpop.f32.mrb[0].mxu0
    %1432 = vmatprep.mubr.bf16.mxu0 %v887
    %1433 = vmatmul.mubr.bf16.gmra.mrb[0].mxu0 %v886
    %v1434 = vpop.f32.mrb[0].mxu0
    %v1435 = vadd.f32 0.0, %v1434
    %v1436 = vpop.f32.mrb[0].mxu0
    %v1437 = vpop.f32.mrb[0].mxu0
    %v1438 = vadd.f32 0.0, %v1437
    %v1439 = vpop.f32.mrb[0].mxu0
    %1440 = vmatprep.mubr.bf16.mxu0 %v889
    %1441 = vmatmul.mubr.bf16.gmra.mrb[0].mxu0 %v888
    %v1442 = vpop.f32.mrb[0].mxu0
    %v1443 = vadd.f32 0.0, %v1442
    %v1444 = vpop.f32.mrb[0].mxu0
    %v1445 = vpop.f32.mrb[0].mxu0
    %v1446 = vadd.f32 0.0, %v1445
    %v1447 = vpop.f32.mrb[0].mxu0
    %1448 = vmatprep.mubr.bf16.mxu0 %v891
    %1449 = vmatmul.mubr.bf16.gmra.mrb[0].mxu0 %v890
    %v1450 = vpop.f32.mrb[0].mxu0
    %v1451 = vadd.f32 0.0, %v1450
    %v1452 = vpop.f32.mrb[0].mxu0
    %v1453 = vpop.f32.mrb[0].mxu0
    %v1454 = vadd.f32 0.0, %v1453
    %v1455 = vpop.f32.mrb[0].mxu0
    %1456 = vmatprep.mubr.bf16.mxu0 %v893
    %1457 = vmatmul.mubr.bf16.gmra.mrb[0].mxu0 %v892
    %v1458 = vpop.f32.mrb[0].mxu0
    %v1459 = vadd.f32 0.0, %v1458
    %v1460 = vpop.f32.mrb[0].mxu0
    %v1461 = vpop.f32.mrb[0].mxu0
    %v1462 = vadd.f32 0.0, %v1461
    %v1463 = vpop.f32.mrb[0].mxu0
    %1464 = vmatprep.mubr.bf16.mxu0 %v895
    %1465 = vmatmul.mubr.bf16.gmra.mrb[0].mxu0 %v894
    %v1466 = vpop.f32.mrb[0].mxu0
    %v1467 = vadd.f32 0.0, %v1466
    %v1468 = vpop.f32.mrb[0].mxu0
    %v1469 = vpop.f32.mrb[0].mxu0
    %v1470 = vadd.f32 0.0, %v1469
    %v1471 = vpop.f32.mrb[0].mxu0
    %1472 = vmatprep.mubr.bf16.mxu0 %v897
    %1473 = vmatmul.mubr.bf16.gmra.mrb[0].mxu0 %v896
    %v1474 = vpop.f32.mrb[0].mxu0
    %v1475 = vadd.f32 0.0, %v1474
    %v1476 = vpop.f32.mrb[0].mxu0
    %v1477 = vpop.f32.mrb[0].mxu0
    %v1478 = vadd.f32 0.0, %v1477
    %v1479 = vpop.f32.mrb[0].mxu0
    %1480 = vmatprep.mubr.bf16.mxu0 %v899
    %1481 = vmatmul.mubr.bf16.gmra.mrb[0].mxu0 %v898
    %v1482 = vpop.f32.mrb[0].mxu0
    %v1483 = vadd.f32 0.0, %v1482
    %v1484 = vpop.f32.mrb[0].mxu0
    %v1485 = vpop.f32.mrb[0].mxu0
    %v1486 = vadd.f32 0.0, %v1485
    %v1487 = vpop.f32.mrb[0].mxu0
    %1488 = vmatprep.mubr.bf16.mxu0 %v901
    %1489 = vmatmul.mubr.bf16.gmra.mrb[0].mxu0 %v900
    %v1490 = vpop.f32.mrb[0].mxu0
    %v1491 = vadd.f32 0.0, %v1490
    %v1492 = vpop.f32.mrb[0].mxu0
    %v1493 = vpop.f32.mrb[0].mxu0
    %v1494 = vadd.f32 0.0, %v1493
    %v1495 = vpop.f32.mrb[0].mxu0
    %1496 = vmatprep.mubr.bf16.mxu0 %v903
    %1497 = vmatmul.mubr.bf16.gmra.mrb[0].mxu0 %v902
    %v1498 = vpop.f32.mrb[0].mxu0
    %v1499 = vadd.f32 0.0, %v1498
    %v1500 = vpop.f32.mrb[0].mxu0
    %v1501 = vpop.f32.mrb[0].mxu0
    %v1502 = vadd.f32 0.0, %v1501
    %v1503 = vpop.f32.mrb[0].mxu0
    %1504 = vmatprep.mubr.bf16.mxu0 %v905
    %1505 = vmatmul.mubr.bf16.gmra.mrb[0].mxu0 %v904
    %v1506 = vpop.f32.mrb[0].mxu0
    %v1507 = vadd.f32 0.0, %v1506
    %v1508 = vpop.f32.mrb[0].mxu0
    %v1509 = vpop.f32.mrb[0].mxu0
    %v1510 = vadd.f32 0.0, %v1509
    %v1511 = vpop.f32.mrb[0].mxu0
    %1512 = vmatprep.mubr.bf16.mxu0 %v907
    %1513 = vmatmul.mubr.bf16.gmra.mrb[0].mxu0 %v906
    %v1514 = vpop.f32.mrb[0].mxu0
    %v1515 = vadd.f32 0.0, %v1514
    %v1516 = vpop.f32.mrb[0].mxu0
    %v1517 = vpop.f32.mrb[0].mxu0
    %v1518 = vadd.f32 0.0, %v1517
    %v1519 = vpop.f32.mrb[0].mxu0
    %1520 = vmatprep.mubr.bf16.mxu0 %v909
    %1521 = vmatmul.mubr.bf16.gmra.mrb[0].mxu0 %v908
    %v1522 = vpop.f32.mrb[0].mxu0
    %v1523 = vadd.f32 0.0, %v1522
    %v1524 = vpop.f32.mrb[0].mxu0
    %v1525 = vpop.f32.mrb[0].mxu0
    %v1526 = vadd.f32 0.0, %v1525
    %v1527 = vpop.f32.mrb[0].mxu0
    %1528 = vmatprep.mubr.bf16.mxu0 %v911
    %1529 = vmatmul.mubr.bf16.gmra.mrb[0].mxu0 %v910
    %v1530 = vpop.f32.mrb[0].mxu0
    %v1531 = vadd.f32 0.0, %v1530
    %v1532 = vpop.f32.mrb[0].mxu0
    %v1533 = vpop.f32.mrb[0].mxu0
    %v1534 = vadd.f32 0.0, %v1533
    %v1535 = vpop.f32.mrb[0].mxu0
    %1536 = vmatprep.mubr.bf16.mxu0 %v913
    %1537 = vmatmul.mubr.bf16.gmra.mrb[0].mxu0 %v912
    %v1538 = vpop.f32.mrb[0].mxu0
    %v1539 = vadd.f32 0.0, %v1538
    %v1540 = vpop.f32.mrb[0].mxu0
    %v1541 = vpop.f32.mrb[0].mxu0
    %v1542 = vadd.f32 0.0, %v1541
    %v1543 = vpop.f32.mrb[0].mxu0
    %1544 = vmatprep.mubr.bf16.mxu0 %v915
    %1545 = vmatmul.mubr.bf16.gmra.mrb[0].mxu0 %v914
    %v1546 = vpop.f32.mrb[0].mxu0
    %v1547 = vadd.f32 0.0, %v1546
    %v1548 = vpop.f32.mrb[0].mxu0
    %v1549 = vpop.f32.mrb[0].mxu0
    %v1550 = vadd.f32 0.0, %v1549
    %v1551 = vpop.f32.mrb[0].mxu0
    %1552 = vmatprep.mubr.bf16.mxu0 %v917
    %1553 = vmatmul.mubr.bf16.gmra.mrb[0].mxu0 %v916
    %v1554 = vpop.f32.mrb[0].mxu0
    %v1555 = vadd.f32 0.0, %v1554
    %v1556 = vpop.f32.mrb[0].mxu0
    %v1557 = vpop.f32.mrb[0].mxu0
    %v1558 = vadd.f32 0.0, %v1557
    %v1559 = vpop.f32.mrb[0].mxu0
    %1560 = vmatprep.mubr.bf16.mxu0 %v919
    %1561 = vmatmul.mubr.bf16.gmra.mrb[0].mxu0 %v918
    %v1562 = vpop.f32.mrb[0].mxu0
    %v1563 = vadd.f32 0.0, %v1562
    %v1564 = vpop.f32.mrb[0].mxu0
    %v1565 = vpop.f32.mrb[0].mxu0
    %v1566 = vadd.f32 0.0, %v1565
    %v1567 = vpop.f32.mrb[0].mxu0
    %1568 = vmatprep.mubr.bf16.mxu0 %v921
    %1569 = vmatmul.mubr.bf16.gmra.mrb[0].mxu0 %v920
    %v1570 = vpop.f32.mrb[0].mxu0
    %v1571 = vadd.f32 0.0, %v1570
    %v1572 = vpop.f32.mrb[0].mxu0
    %v1573 = vpop.f32.mrb[0].mxu0
    %v1574 = vadd.f32 0.0, %v1573
    %v1575 = vpop.f32.mrb[0].mxu0
    %1576 = vmatprep.mubr.bf16.mxu0 %v923
    %1577 = vmatmul.mubr.bf16.gmra.mrb[0].mxu0 %v922
    %v1578 = vpop.f32.mrb[0].mxu0
    %v1579 = vadd.f32 0.0, %v1578
    %v1580 = vpop.f32.mrb[0].mxu0
    %v1581 = vpop.f32.mrb[0].mxu0
    %v1582 = vadd.f32 0.0, %v1581
    %v1583 = vpop.f32.mrb[0].mxu0
    %1584 = vmatprep.mubr.bf16.mxu0 %v925
    %1585 = vmatmul.mubr.bf16.gmra.mrb[0].mxu0 %v924
    %v1586 = vpop.f32.mrb[0].mxu0
    %v1587 = vadd.f32 0.0, %v1586
    %v1588 = vpop.f32.mrb[0].mxu0
    %v1589 = vpop.f32.mrb[0].mxu0
    %v1590 = vadd.f32 0.0, %v1589
    %v1591 = vpop.f32.mrb[0].mxu0
    %1592 = vmatprep.mubr.bf16.mxu0 %v927
    %1593 = vmatmul.mubr.bf16.gmra.mrb[0].mxu0 %v926
    %v1594 = vpop.f32.mrb[0].mxu0
    %v1595 = vadd.f32 0.0, %v1594
    %v1596 = vpop.f32.mrb[0].mxu0
    %v1597 = vpop.f32.mrb[0].mxu0
    %v1598 = vadd.f32 0.0, %v1597
    %v1599 = vpop.f32.mrb[0].mxu0
    %1600 = vmatprep.mubr.bf16.mxu0 %v929
    %1601 = vmatmul.mubr.bf16.gmra.mrb[0].mxu0 %v928
    %v1602 = vpop.f32.mrb[0].mxu0
    %v1603 = vadd.f32 0.0, %v1602
    %v1604 = vpop.f32.mrb[0].mxu0
    %v1605 = vpop.f32.mrb[0].mxu0
    %v1606 = vadd.f32 0.0, %v1605
    %v1607 = vpop.f32.mrb[0].mxu0
    %1608 = vmatprep.mubr.bf16.mxu0 %v931
    %1609 = vmatmul.mubr.bf16.gmra.mrb[0].mxu0 %v930
    %v1610 = vpop.f32.mrb[0].mxu0
    %v1611 = vadd.f32 0.0, %v1610
    %v1612 = vpop.f32.mrb[0].mxu0
    %v1613 = vpop.f32.mrb[0].mxu0
    %v1614 = vadd.f32 0.0, %v1613
    %v1615 = vpop.f32.mrb[0].mxu0
    %1616 = vmatprep.mubr.bf16.mxu0 %v933
    %1617 = vmatmul.mubr.bf16.gmra.mrb[0].mxu0 %v932
    %v1618 = vpop.f32.mrb[0].mxu0
    %v1619 = vadd.f32 0.0, %v1618
    %v1620 = vpop.f32.mrb[0].mxu0
    %v1621 = vpop.f32.mrb[0].mxu0
    %v1622 = vadd.f32 0.0, %v1621
    %v1623 = vpop.f32.mrb[0].mxu0
    %1624 = vmatprep.mubr.bf16.mxu0 %v935
    %1625 = vmatmul.mubr.bf16.gmra.mrb[0].mxu0 %v934
    %v1626 = vpop.f32.mrb[0].mxu0
    %v1627 = vadd.f32 0.0, %v1626
    %v1628 = vpop.f32.mrb[0].mxu0
    %v1629 = vpop.f32.mrb[0].mxu0
    %v1630 = vadd.f32 0.0, %v1629
    %v1631 = vpop.f32.mrb[0].mxu0
    %1632 = vmatprep.mubr.bf16.mxu0 %v937
    %1633 = vmatmul.mubr.bf16.gmra.mrb[0].mxu0 %v936
    %v1634 = vpop.f32.mrb[0].mxu0
    %v1635 = vadd.f32 0.0, %v1634
    %v1636 = vpop.f32.mrb[0].mxu0
    %v1637 = vpop.f32.mrb[0].mxu0
    %v1638 = vadd.f32 0.0, %v1637
    %v1639 = vpop.f32.mrb[0].mxu0
    %1640 = vmatprep.mubr.bf16.mxu0 %v939
    %1641 = vmatmul.mubr.bf16.gmra.mrb[0].mxu0 %v938
    %v1642 = vpop.f32.mrb[0].mxu0
    %v1643 = vadd.f32 0.0, %v1642
    %v1644 = vpop.f32.mrb[0].mxu0
    %v1645 = vpop.f32.mrb[0].mxu0
    %v1646 = vadd.f32 0.0, %v1645
    %v1647 = vpop.f32.mrb[0].mxu0
    %1648 = vmatprep.mubr.bf16.mxu0 %v941
    %1649 = vmatmul.mubr.bf16.gmra.mrb[0].mxu0 %v940
    %v1650 = vpop.f32.mrb[0].mxu0
    %v1651 = vadd.f32 0.0, %v1650
    %v1652 = vpop.f32.mrb[0].mxu0
    %v1653 = vpop.f32.mrb[0].mxu0
    %v1654 = vadd.f32 0.0, %v1653
    %v1655 = vpop.f32.mrb[0].mxu0
    %1656 = vmatprep.mubr.bf16.mxu0 %v943
    %1657 = vmatmul.mubr.bf16.gmra.mrb[0].mxu0 %v942
    %v1658 = vpop.f32.mrb[0].mxu0
    %v1659 = vadd.f32 0.0, %v1658
    %v1660 = vpop.f32.mrb[0].mxu0
    %v1661 = vpop.f32.mrb[0].mxu0
    %v1662 = vadd.f32 0.0, %v1661
    %v1663 = vpop.f32.mrb[0].mxu0
    %1664 = vmatprep.mubr.bf16.mxu0 %v945
    %1665 = vmatmul.mubr.bf16.gmra.mrb[0].mxu0 %v944
    %v1666 = vpop.f32.mrb[0].mxu0
    %v1667 = vadd.f32 0.0, %v1666
    %v1668 = vpop.f32.mrb[0].mxu0
    %v1669 = vpop.f32.mrb[0].mxu0
    %v1670 = vadd.f32 0.0, %v1669
    %v1671 = vpop.f32.mrb[0].mxu0
    %1672 = vmatprep.mubr.bf16.mxu0 %v947
    %1673 = vmatmul.mubr.bf16.gmra.mrb[0].mxu0 %v946
    %v1674 = vpop.f32.mrb[0].mxu0
    %v1675 = vadd.f32 0.0, %v1674
    %v1676 = vpop.f32.mrb[0].mxu0
    %v1677 = vpop.f32.mrb[0].mxu0
    %v1678 = vadd.f32 0.0, %v1677
    %v1679 = vpop.f32.mrb[0].mxu0
    %1680 = vmatprep.mubr.bf16.mxu0 %v949
    %1681 = vmatmul.mubr.bf16.gmra.mrb[0].mxu0 %v948
    %v1682 = vpop.f32.mrb[0].mxu0
    %v1683 = vadd.f32 0.0, %v1682
    %v1684 = vpop.f32.mrb[0].mxu0
    %v1685 = vpop.f32.mrb[0].mxu0
    %v1686 = vadd.f32 0.0, %v1685
    %v1687 = vpop.f32.mrb[0].mxu0
    %1688 = vmatprep.mubr.bf16.mxu0 %v951
    %1689 = vmatmul.mubr.bf16.gmra.mrb[0].mxu0 %v950
    %v1690 = vpop.f32.mrb[0].mxu0
    %v1691 = vadd.f32 0.0, %v1690
    %v1692 = vpop.f32.mrb[0].mxu0
    %v1693 = vpop.f32.mrb[0].mxu0
    %v1694 = vadd.f32 0.0, %v1693
    %v1695 = vpop.f32.mrb[0].mxu0
    %1696 = vmatprep.mubr.bf16.mxu0 %v953
    %1697 = vmatmul.mubr.bf16.gmra.mrb[0].mxu0 %v952
    %v1698 = vpop.f32.mrb[0].mxu0
    %v1699 = vadd.f32 0.0, %v1698
    %v1700 = vpop.f32.mrb[0].mxu0
    %v1701 = vpop.f32.mrb[0].mxu0
    %v1702 = vadd.f32 0.0, %v1701
    %v1703 = vpop.f32.mrb[0].mxu0
    %1704 = vmatprep.mubr.bf16.mxu0 %v955
    %1705 = vmatmul.mubr.bf16.gmra.mrb[0].mxu0 %v954
    %v1706 = vpop.f32.mrb[0].mxu0
    %v1707 = vadd.f32 0.0, %v1706
    %v1708 = vpop.f32.mrb[0].mxu0
    %v1709 = vpop.f32.mrb[0].mxu0
    %v1710 = vadd.f32 0.0, %v1709
    %v1711 = vpop.f32.mrb[0].mxu0
    %1712 = vmatprep.mubr.bf16.mxu0 %v957
    %1713 = vmatmul.mubr.bf16.gmra.mrb[0].mxu0 %v956
    %v1714 = vpop.f32.mrb[0].mxu0
    %v1715 = vadd.f32 0.0, %v1714
    %v1716 = vpop.f32.mrb[0].mxu0
    %v1717 = vpop.f32.mrb[0].mxu0
    %v1718 = vadd.f32 0.0, %v1717
    %v1719 = vpop.f32.mrb[0].mxu0
    %1720 = vmatprep.mubr.bf16.mxu0 %v959
    %1721 = vmatmul.mubr.bf16.gmra.mrb[0].mxu0 %v958
    %v1722 = vpop.f32.mrb[0].mxu0
    %v1723 = vadd.f32 0.0, %v1722
    %v1724 = vpop.f32.mrb[0].mxu0
    %v1725 = vpop.f32.mrb[0].mxu0
    %v1726 = vadd.f32 0.0, %v1725
    %v1727 = vpop.f32.mrb[0].mxu0
    %1728 = vdwg.mxu0
    %v1729 = vadd.f32 %v288, %v1219
    %v1730 = vadd.f32 %v289, %v1222
    %v1731 = vadd.f32 %v290, %v1227
    %v1732 = vadd.f32 %v291, %v1230
    %v1733 = vadd.f32 %v292, %v1235
    %v1734 = vadd.f32 %v293, %v1238
    %v1735 = vadd.f32 %v294, %v1243
    %v1736 = vadd.f32 %v295, %v1246
    %v1737 = vadd.f32 %v296, %v1251
    %v1738 = vadd.f32 %v297, %v1254
    %v1739 = vadd.f32 %v298, %v1259
    %v1740 = vadd.f32 %v299, %v1262
    %v1741 = vadd.f32 %v300, %v1267
    %v1742 = vadd.f32 %v301, %v1270
    %v1743 = vadd.f32 %v302, %v1275
    %v1744 = vadd.f32 %v303, %v1278
    %v1745 = vadd.f32 %v304, %v1283
    %v1746 = vadd.f32 %v305, %v1286
    %v1747 = vadd.f32 %v306, %v1291
    %v1748 = vadd.f32 %v307, %v1294
    %v1749 = vadd.f32 %v308, %v1299
    %v1750 = vadd.f32 %v309, %v1302
    %v1751 = vadd.f32 %v310, %v1307
    %v1752 = vadd.f32 %v311, %v1310
    %v1753 = vadd.f32 %v312, %v1315
    %v1754 = vadd.f32 %v313, %v1318
    %v1755 = vadd.f32 %v314, %v1323
    %v1756 = vadd.f32 %v315, %v1326
    %v1757 = vadd.f32 %v316, %v1331
    %v1758 = vadd.f32 %v317, %v1334
    %v1759 = vadd.f32 %v318, %v1339
    %v1760 = vadd.f32 %v319, %v1342
    %v1761 = vadd.f32 %v320, %v1347
    %v1762 = vadd.f32 %v321, %v1350
    %v1763 = vadd.f32 %v322, %v1355
    %v1764 = vadd.f32 %v323, %v1358
    %v1765 = vadd.f32 %v324, %v1363
    %v1766 = vadd.f32 %v325, %v1366
    %v1767 = vadd.f32 %v326, %v1371
    %v1768 = vadd.f32 %v327, %v1374
    %v1769 = vadd.f32 %v328, %v1379
    %v1770 = vadd.f32 %v329, %v1382
    %v1771 = vadd.f32 %v330, %v1387
    %v1772 = vadd.f32 %v331, %v1390
    %v1773 = vadd.f32 %v332, %v1395
    %v1774 = vadd.f32 %v333, %v1398
    %v1775 = vadd.f32 %v334, %v1403
    %v1776 = vadd.f32 %v335, %v1406
    %v1777 = vadd.f32 %v336, %v1411
    %v1778 = vadd.f32 %v337, %v1414
    %v1779 = vadd.f32 %v338, %v1419
    %v1780 = vadd.f32 %v339, %v1422
    %v1781 = vadd.f32 %v340, %v1427
    %v1782 = vadd.f32 %v341, %v1430
    %v1783 = vadd.f32 %v342, %v1435
    %v1784 = vadd.f32 %v343, %v1438
    %v1785 = vadd.f32 %v344, %v1443
    %v1786 = vadd.f32 %v345, %v1446
    %v1787 = vadd.f32 %v346, %v1451
    %v1788 = vadd.f32 %v347, %v1454
    %v1789 = vadd.f32 %v348, %v1459
    %v1790 = vadd.f32 %v349, %v1462
    %v1791 = vadd.f32 %v350, %v1467
    %v1792 = vadd.f32 %v351, %v1470
    %v1793 = vadd.f32 %v352, %v1475
    %v1794 = vadd.f32 %v353, %v1478
    %v1795 = vadd.f32 %v354, %v1483
    %v1796 = vadd.f32 %v355, %v1486
    %v1797 = vadd.f32 %v356, %v1491
    %v1798 = vadd.f32 %v357, %v1494
    %v1799 = vadd.f32 %v358, %v1499
    %v1800 = vadd.f32 %v359, %v1502
    %v1801 = vadd.f32 %v360, %v1507
    %v1802 = vadd.f32 %v361, %v1510
    %v1803 = vadd.f32 %v362, %v1515
    %v1804 = vadd.f32 %v363, %v1518
    %v1805 = vadd.f32 %v364, %v1523
    %v1806 = vadd.f32 %v365, %v1526
    %v1807 = vadd.f32 %v366, %v1531
    %v1808 = vadd.f32 %v367, %v1534
    %v1809 = vadd.f32 %v368, %v1539
    %v1810 = vadd.f32 %v369, %v1542
    %v1811 = vadd.f32 %v370, %v1547
    %v1812 = vadd.f32 %v371, %v1550
    %v1813 = vadd.f32 %v372, %v1555
    %v1814 = vadd.f32 %v373, %v1558
    %v1815 = vadd.f32 %v374, %v1563
    %v1816 = vadd.f32 %v375, %v1566
    %v1817 = vadd.f32 %v376, %v1571
    %v1818 = vadd.f32 %v377, %v1574
    %v1819 = vadd.f32 %v378, %v1579
    %v1820 = vadd.f32 %v379, %v1582
    %v1821 = vadd.f32 %v380, %v1587
    %v1822 = vadd.f32 %v381, %v1590
    %v1823 = vadd.f32 %v382, %v1595
    %v1824 = vadd.f32 %v383, %v1598
    %v1825 = vadd.f32 %v384, %v1603
    %v1826 = vadd.f32 %v385, %v1606
    %v1827 = vadd.f32 %v386, %v1611
    %v1828 = vadd.f32 %v387, %v1614
    %v1829 = vadd.f32 %v388, %v1619
    %v1830 = vadd.f32 %v389, %v1622
    %v1831 = vadd.f32 %v390, %v1627
    %v1832 = vadd.f32 %v391, %v1630
    %v1833 = vadd.f32 %v392, %v1635
    %v1834 = vadd.f32 %v393, %v1638
    %v1835 = vadd.f32 %v394, %v1643
    %v1836 = vadd.f32 %v395, %v1646
    %v1837 = vadd.f32 %v396, %v1651
    %v1838 = vadd.f32 %v397, %v1654
    %v1839 = vadd.f32 %v398, %v1659
    %v1840 = vadd.f32 %v399, %v1662
    %v1841 = vadd.f32 %v400, %v1667
    %v1842 = vadd.f32 %v401, %v1670
    %v1843 = vadd.f32 %v402, %v1675
    %v1844 = vadd.f32 %v403, %v1678
    %v1845 = vadd.f32 %v404, %v1683
    %v1846 = vadd.f32 %v405, %v1686
    %v1847 = vadd.f32 %v406, %v1691
    %v1848 = vadd.f32 %v407, %v1694
    %v1849 = vadd.f32 %v408, %v1699
    %v1850 = vadd.f32 %v409, %v1702
    %v1851 = vadd.f32 %v410, %v1707
    %v1852 = vadd.f32 %v411, %v1710
    %v1853 = vadd.f32 %v412, %v1715
    %v1854 = vadd.f32 %v413, %v1718
    %v1855 = vadd.f32 %v414, %v1723
    %v1856 = vadd.f32 %v415, %v1726
    %vm1857 = vcmask 261120
    %1858 = vst.msk [vmem:[#allocation2] sm:$0xff] %vm1857, %v1729
    %1859 = vst.msk [vmem:[#allocation2 + $0x8] sm:$0xff] %vm1857, %v1730
    %1860 = vst.msk [vmem:[#allocation2 + $0x10] sm:$0xff] %vm1857, %v1731
    %1861 = vst.msk [vmem:[#allocation2 + $0x18] sm:$0xff] %vm1857, %v1732
    %1862 = vst.msk [vmem:[#allocation2 + $0x20] sm:$0xff] %vm1857, %v1733
    %1863 = vst.msk [vmem:[#allocation2 + $0x28] sm:$0xff] %vm1857, %v1734
    %1864 = vst.msk [vmem:[#allocation2 + $0x30] sm:$0xff] %vm1857, %v1735
    %1865 = vst.msk [vmem:[#allocation2 + $0x38] sm:$0xff] %vm1857, %v1736
    %1866 = vst.msk [vmem:[#allocation2 + $0x40] sm:$0xff] %vm1857, %v1737
    %1867 = vst.msk [vmem:[#allocation2 + $0x48] sm:$0xff] %vm1857, %v1738
    %1868 = vst.msk [vmem:[#allocation2 + $0x50] sm:$0xff] %vm1857, %v1739
    %1869 = vst.msk [vmem:[#allocation2 + $0x58] sm:$0xff] %vm1857, %v1740
    %1870 = vst.msk [vmem:[#allocation2 + $0x60] sm:$0xff] %vm1857, %v1741
    %1871 = vst.msk [vmem:[#allocation2 + $0x68] sm:$0xff] %vm1857, %v1742
    %1872 = vst.msk [vmem:[#allocation2 + $0x70] sm:$0xff] %vm1857, %v1743
    %1873 = vst.msk [vmem:[#allocation2 + $0x78] sm:$0xff] %vm1857, %v1744
    %1874 = vst.msk [vmem:[#allocation2 + $0x80] sm:$0xff] %vm1857, %v1745
    %1875 = vst.msk [vmem:[#allocation2 + $0x88] sm:$0xff] %vm1857, %v1746
    %1876 = vst.msk [vmem:[#allocation2 + $0x90] sm:$0xff] %vm1857, %v1747
    %1877 = vst.msk [vmem:[#allocation2 + $0x98] sm:$0xff] %vm1857, %v1748
    %1878 = vst.msk [vmem:[#allocation2 + $0xa0] sm:$0xff] %vm1857, %v1749
    %1879 = vst.msk [vmem:[#allocation2 + $0xa8] sm:$0xff] %vm1857, %v1750
    %1880 = vst.msk [vmem:[#allocation2 + $0xb0] sm:$0xff] %vm1857, %v1751
    %1881 = vst.msk [vmem:[#allocation2 + $0xb8] sm:$0xff] %vm1857, %v1752
    %1882 = vst.msk [vmem:[#allocation2 + $0xc0] sm:$0xff] %vm1857, %v1753
    %1883 = vst.msk [vmem:[#allocation2 + $0xc8] sm:$0xff] %vm1857, %v1754
    %1884 = vst.msk [vmem:[#allocation2 + $0xd0] sm:$0xff] %vm1857, %v1755
    %1885 = vst.msk [vmem:[#allocation2 + $0xd8] sm:$0xff] %vm1857, %v1756
    %1886 = vst.msk [vmem:[#allocation2 + $0xe0] sm:$0xff] %vm1857, %v1757
    %1887 = vst.msk [vmem:[#allocation2 + $0xe8] sm:$0xff] %vm1857, %v1758
    %1888 = vst.msk [vmem:[#allocation2 + $0xf0] sm:$0xff] %vm1857, %v1759
    %1889 = vst.msk [vmem:[#allocation2 + $0xf8] sm:$0xff] %vm1857, %v1760
    %1890 = vst.msk [vmem:[#allocation2 + $0x100] sm:$0xff] %vm1857, %v1761
    %1891 = vst.msk [vmem:[#allocation2 + $0x108] sm:$0xff] %vm1857, %v1762
    %1892 = vst.msk [vmem:[#allocation2 + $0x110] sm:$0xff] %vm1857, %v1763
    %1893 = vst.msk [vmem:[#allocation2 + $0x118] sm:$0xff] %vm1857, %v1764
    %1894 = vst.msk [vmem:[#allocation2 + $0x120] sm:$0xff] %vm1857, %v1765
    %1895 = vst.msk [vmem:[#allocation2 + $0x128] sm:$0xff] %vm1857, %v1766
    %1896 = vst.msk [vmem:[#allocation2 + $0x130] sm:$0xff] %vm1857, %v1767
    %1897 = vst.msk [vmem:[#allocation2 + $0x138] sm:$0xff] %vm1857, %v1768
    %1898 = vst.msk [vmem:[#allocation2 + $0x140] sm:$0xff] %vm1857, %v1769
    %1899 = vst.msk [vmem:[#allocation2 + $0x148] sm:$0xff] %vm1857, %v1770
    %1900 = vst.msk [vmem:[#allocation2 + $0x150] sm:$0xff] %vm1857, %v1771
    %1901 = vst.msk [vmem:[#allocation2 + $0x158] sm:$0xff] %vm1857, %v1772
    %1902 = vst.msk [vmem:[#allocation2 + $0x160] sm:$0xff] %vm1857, %v1773
    %1903 = vst.msk [vmem:[#allocation2 + $0x168] sm:$0xff] %vm1857, %v1774
    %1904 = vst.msk [vmem:[#allocation2 + $0x170] sm:$0xff] %vm1857, %v1775
    %1905 = vst.msk [vmem:[#allocation2 + $0x178] sm:$0xff] %vm1857, %v1776
    %1906 = vst.msk [vmem:[#allocation2 + $0x180] sm:$0xff] %vm1857, %v1777
    %1907 = vst.msk [vmem:[#allocation2 + $0x188] sm:$0xff] %vm1857, %v1778
    %1908 = vst.msk [vmem:[#allocation2 + $0x190] sm:$0xff] %vm1857, %v1779
    %1909 = vst.msk [vmem:[#allocation2 + $0x198] sm:$0xff] %vm1857, %v1780
    %1910 = vst.msk [vmem:[#allocation2 + $0x1a0] sm:$0xff] %vm1857, %v1781
    %1911 = vst.msk [vmem:[#allocation2 + $0x1a8] sm:$0xff] %vm1857, %v1782
    %1912 = vst.msk [vmem:[#allocation2 + $0x1b0] sm:$0xff] %vm1857, %v1783
    %1913 = vst.msk [vmem:[#allocation2 + $0x1b8] sm:$0xff] %vm1857, %v1784
    %1914 = vst.msk [vmem:[#allocation2 + $0x1c0] sm:$0xff] %vm1857, %v1785
    %1915 = vst.msk [vmem:[#allocation2 + $0x1c8] sm:$0xff] %vm1857, %v1786
    %1916 = vst.msk [vmem:[#allocation2 + $0x1d0] sm:$0xff] %vm1857, %v1787
    %1917 = vst.msk [vmem:[#allocation2 + $0x1d8] sm:$0xff] %vm1857, %v1788
    %1918 = vst.msk [vmem:[#allocation2 + $0x1e0] sm:$0xff] %vm1857, %v1789
    %1919 = vst.msk [vmem:[#allocation2 + $0x1e8] sm:$0xff] %vm1857, %v1790
    %1920 = vst.msk [vmem:[#allocation2 + $0x1f0] sm:$0xff] %vm1857, %v1791
    %1921 = vst.msk [vmem:[#allocation2 + $0x1f8] sm:$0xff] %vm1857, %v1792
    %1922 = vst.msk [vmem:[#allocation2 + $0x200] sm:$0xff] %vm1857, %v1793
    %1923 = vst.msk [vmem:[#allocation2 + $0x208] sm:$0xff] %vm1857, %v1794
    %1924 = vst.msk [vmem:[#allocation2 + $0x210] sm:$0xff] %vm1857, %v1795
    %1925 = vst.msk [vmem:[#allocation2 + $0x218] sm:$0xff] %vm1857, %v1796
    %1926 = vst.msk [vmem:[#allocation2 + $0x220] sm:$0xff] %vm1857, %v1797
    %1927 = vst.msk [vmem:[#allocation2 + $0x228] sm:$0xff] %vm1857, %v1798
    %1928 = vst.msk [vmem:[#allocation2 + $0x230] sm:$0xff] %vm1857, %v1799
    %1929 = vst.msk [vmem:[#allocation2 + $0x238] sm:$0xff] %vm1857, %v1800
    %1930 = vst.msk [vmem:[#allocation2 + $0x240] sm:$0xff] %vm1857, %v1801
    %1931 = vst.msk [vmem:[#allocation2 + $0x248] sm:$0xff] %vm1857, %v1802
    %1932 = vst.msk [vmem:[#allocation2 + $0x250] sm:$0xff] %vm1857, %v1803
    %1933 = vst.msk [vmem:[#allocation2 + $0x258] sm:$0xff] %vm1857, %v1804
    %1934 = vst.msk [vmem:[#allocation2 + $0x260] sm:$0xff] %vm1857, %v1805
    %1935 = vst.msk [vmem:[#allocation2 + $0x268] sm:$0xff] %vm1857, %v1806
    %1936 = vst.msk [vmem:[#allocation2 + $0x270] sm:$0xff] %vm1857, %v1807
    %1937 = vst.msk [vmem:[#allocation2 + $0x278] sm:$0xff] %vm1857, %v1808
    %1938 = vst.msk [vmem:[#allocation2 + $0x280] sm:$0xff] %vm1857, %v1809
    %1939 = vst.msk [vmem:[#allocation2 + $0x288] sm:$0xff] %vm1857, %v1810
    %1940 = vst.msk [vmem:[#allocation2 + $0x290] sm:$0xff] %vm1857, %v1811
    %1941 = vst.msk [vmem:[#allocation2 + $0x298] sm:$0xff] %vm1857, %v1812
    %1942 = vst.msk [vmem:[#allocation2 + $0x2a0] sm:$0xff] %vm1857, %v1813
    %1943 = vst.msk [vmem:[#allocation2 + $0x2a8] sm:$0xff] %vm1857, %v1814
    %1944 = vst.msk [vmem:[#allocation2 + $0x2b0] sm:$0xff] %vm1857, %v1815
    %1945 = vst.msk [vmem:[#allocation2 + $0x2b8] sm:$0xff] %vm1857, %v1816
    %1946 = vst.msk [vmem:[#allocation2 + $0x2c0] sm:$0xff] %vm1857, %v1817
    %1947 = vst.msk [vmem:[#allocation2 + $0x2c8] sm:$0xff] %vm1857, %v1818
    %1948 = vst.msk [vmem:[#allocation2 + $0x2d0] sm:$0xff] %vm1857, %v1819
    %1949 = vst.msk [vmem:[#allocation2 + $0x2d8] sm:$0xff] %vm1857, %v1820
    %1950 = vst.msk [vmem:[#allocation2 + $0x2e0] sm:$0xff] %vm1857, %v1821
    %1951 = vst.msk [vmem:[#allocation2 + $0x2e8] sm:$0xff] %vm1857, %v1822
    %1952 = vst.msk [vmem:[#allocation2 + $0x2f0] sm:$0xff] %vm1857, %v1823
    %1953 = vst.msk [vmem:[#allocation2 + $0x2f8] sm:$0xff] %vm1857, %v1824
    %1954 = vst.msk [vmem:[#allocation2 + $0x300] sm:$0xff] %vm1857, %v1825
    %1955 = vst.msk [vmem:[#allocation2 + $0x308] sm:$0xff] %vm1857, %v1826
    %1956 = vst.msk [vmem:[#allocation2 + $0x310] sm:$0xff] %vm1857, %v1827
    %1957 = vst.msk [vmem:[#allocation2 + $0x318] sm:$0xff] %vm1857, %v1828
    %1958 = vst.msk [vmem:[#allocation2 + $0x320] sm:$0xff] %vm1857, %v1829
    %1959 = vst.msk [vmem:[#allocation2 + $0x328] sm:$0xff] %vm1857, %v1830
    %1960 = vst.msk [vmem:[#allocation2 + $0x330] sm:$0xff] %vm1857, %v1831
    %1961 = vst.msk [vmem:[#allocation2 + $0x338] sm:$0xff] %vm1857, %v1832
    %1962 = vst.msk [vmem:[#allocation2 + $0x340] sm:$0xff] %vm1857, %v1833
    %1963 = vst.msk [vmem:[#allocation2 + $0x348] sm:$0xff] %vm1857, %v1834
    %1964 = vst.msk [vmem:[#allocation2 + $0x350] sm:$0xff] %vm1857, %v1835
    %1965 = vst.msk [vmem:[#allocation2 + $0x358] sm:$0xff] %vm1857, %v1836
    %1966 = vst.msk [vmem:[#allocation2 + $0x360] sm:$0xff] %vm1857, %v1837
    %1967 = vst.msk [vmem:[#allocation2 + $0x368] sm:$0xff] %vm1857, %v1838
    %1968 = vst.msk [vmem:[#allocation2 + $0x370] sm:$0xff] %vm1857, %v1839
    %1969 = vst.msk [vmem:[#allocation2 + $0x378] sm:$0xff] %vm1857, %v1840
    %1970 = vst.msk [vmem:[#allocation2 + $0x380] sm:$0xff] %vm1857, %v1841
    %1971 = vst.msk [vmem:[#allocation2 + $0x388] sm:$0xff] %vm1857, %v1842
    %1972 = vst.msk [vmem:[#allocation2 + $0x390] sm:$0xff] %vm1857, %v1843
    %1973 = vst.msk [vmem:[#allocation2 + $0x398] sm:$0xff] %vm1857, %v1844
    %1974 = vst.msk [vmem:[#allocation2 + $0x3a0] sm:$0xff] %vm1857, %v1845
    %1975 = vst.msk [vmem:[#allocation2 + $0x3a8] sm:$0xff] %vm1857, %v1846
    %1976 = vst.msk [vmem:[#allocation2 + $0x3b0] sm:$0xff] %vm1857, %v1847
    %1977 = vst.msk [vmem:[#allocation2 + $0x3b8] sm:$0xff] %vm1857, %v1848
    %1978 = vst.msk [vmem:[#allocation2 + $0x3c0] sm:$0xff] %vm1857, %v1849
    %1979 = vst.msk [vmem:[#allocation2 + $0x3c8] sm:$0xff] %vm1857, %v1850
    %1980 = vst.msk [vmem:[#allocation2 + $0x3d0] sm:$0xff] %vm1857, %v1851
    %1981 = vst.msk [vmem:[#allocation2 + $0x3d8] sm:$0xff] %vm1857, %v1852
    %1982 = vst.msk [vmem:[#allocation2 + $0x3e0] sm:$0xff] %vm1857, %v1853
    %1983 = vst.msk [vmem:[#allocation2 + $0x3e8] sm:$0xff] %vm1857, %v1854
    %1984 = vst.msk [vmem:[#allocation2 + $0x3f0] sm:$0xff] %vm1857, %v1855
    %1985 = vst.msk [vmem:[#allocation2 + $0x3f8] sm:$0xff] %vm1857, %v1856
    // Predicated region
    $region18: #{tpu_custom_call.1} parent=1 // pred_check
      %p1986 = pneg %p27
    $region19: #{tpu_custom_call.1} parent=1 // pred_check_branch
      %1988 = sbr.rel (%p1986) target = $region21
    $region20: #{tpu_custom_call.1} parent=1 // pred_region
      %v1989 = vld [vmem:[#allocation2] sm:$0xff]
      %v1990 = vld [vmem:[#allocation2 + $0x8] sm:$0xff]
      %v1991 = vld [vmem:[#allocation2 + $0x10] sm:$0xff]
      %v1992 = vld [vmem:[#allocation2 + $0x18] sm:$0xff]
      %v1993 = vld [vmem:[#allocation2 + $0x20] sm:$0xff]
      %v1994 = vld [vmem:[#allocation2 + $0x28] sm:$0xff]
      %v1995 = vld [vmem:[#allocation2 + $0x30] sm:$0xff]
      %v1996 = vld [vmem:[#allocation2 + $0x38] sm:$0xff]
      %v1997 = vld [vmem:[#allocation2 + $0x40] sm:$0xff]
      %v1998 = vld [vmem:[#allocation2 + $0x48] sm:$0xff]
      %v1999 = vld [vmem:[#allocation2 + $0x50] sm:$0xff]
      %v2000 = vld [vmem:[#allocation2 + $0x58] sm:$0xff]
      %v2001 = vld [vmem:[#allocation2 + $0x60] sm:$0xff]
      %v2002 = vld [vmem:[#allocation2 + $0x68] sm:$0xff]
      %v2003 = vld [vmem:[#allocation2 + $0x70] sm:$0xff]
      %v2004 = vld [vmem:[#allocation2 + $0x78] sm:$0xff]
      %v2005 = vld [vmem:[#allocation2 + $0x80] sm:$0xff]
      %v2006 = vld [vmem:[#allocation2 + $0x88] sm:$0xff]
      %v2007 = vld [vmem:[#allocation2 + $0x90] sm:$0xff]
      %v2008 = vld [vmem:[#allocation2 + $0x98] sm:$0xff]
      %v2009 = vld [vmem:[#allocation2 + $0xa0] sm:$0xff]
      %v2010 = vld [vmem:[#allocation2 + $0xa8] sm:$0xff]
      %v2011 = vld [vmem:[#allocation2 + $0xb0] sm:$0xff]
      %v2012 = vld [vmem:[#allocation2 + $0xb8] sm:$0xff]
      %v2013 = vld [vmem:[#allocation2 + $0xc0] sm:$0xff]
      %v2014 = vld [vmem:[#allocation2 + $0xc8] sm:$0xff]
      %v2015 = vld [vmem:[#allocation2 + $0xd0] sm:$0xff]
      %v2016 = vld [vmem:[#allocation2 + $0xd8] sm:$0xff]
      %v2017 = vld [vmem:[#allocation2 + $0xe0] sm:$0xff]
      %v2018 = vld [vmem:[#allocation2 + $0xe8] sm:$0xff]
      %v2019 = vld [vmem:[#allocation2 + $0xf0] sm:$0xff]
      %v2020 = vld [vmem:[#allocation2 + $0xf8] sm:$0xff]
      %v2021 = vld [vmem:[#allocation2 + $0x100] sm:$0xff]
      %v2022 = vld [vmem:[#allocation2 + $0x108] sm:$0xff]
      %v2023 = vld [vmem:[#allocation2 + $0x110] sm:$0xff]
      %v2024 = vld [vmem:[#allocation2 + $0x118] sm:$0xff]
      %v2025 = vld [vmem:[#allocation2 + $0x120] sm:$0xff]
      %v2026 = vld [vmem:[#allocation2 + $0x128] sm:$0xff]
      %v2027 = vld [vmem:[#allocation2 + $0x130] sm:$0xff]
      %v2028 = vld [vmem:[#allocation2 + $0x138] sm:$0xff]
      %v2029 = vld [vmem:[#allocation2 + $0x140] sm:$0xff]
      %v2030 = vld [vmem:[#allocation2 + $0x148] sm:$0xff]
      %v2031 = vld [vmem:[#allocation2 + $0x150] sm:$0xff]
      %v2032 = vld [vmem:[#allocation2 + $0x158] sm:$0xff]
      %v2033 = vld [vmem:[#allocation2 + $0x160] sm:$0xff]
      %v2034 = vld [vmem:[#allocation2 + $0x168] sm:$0xff]
      %v2035 = vld [vmem:[#allocation2 + $0x170] sm:$0xff]
      %v2036 = vld [vmem:[#allocation2 + $0x178] sm:$0xff]
      %v2037 = vld [vmem:[#allocation2 + $0x180] sm:$0xff]
      %v2038 = vld [vmem:[#allocation2 + $0x188] sm:$0xff]
      %v2039 = vld [vmem:[#allocation2 + $0x190] sm:$0xff]
      %v2040 = vld [vmem:[#allocation2 + $0x198] sm:$0xff]
      %v2041 = vld [vmem:[#allocation2 + $0x1a0] sm:$0xff]
      %v2042 = vld [vmem:[#allocation2 + $0x1a8] sm:$0xff]
      %v2043 = vld [vmem:[#allocation2 + $0x1b0] sm:$0xff]
      %v2044 = vld [vmem:[#allocation2 + $0x1b8] sm:$0xff]
      %v2045 = vld [vmem:[#allocation2 + $0x1c0] sm:$0xff]
      %v2046 = vld [vmem:[#allocation2 + $0x1c8] sm:$0xff]
      %v2047 = vld [vmem:[#allocation2 + $0x1d0] sm:$0xff]
      %v2048 = vld [vmem:[#allocation2 + $0x1d8] sm:$0xff]
      %v2049 = vld [vmem:[#allocation2 + $0x1e0] sm:$0xff]
      %v2050 = vld [vmem:[#allocation2 + $0x1e8] sm:$0xff]
      %v2051 = vld [vmem:[#allocation2 + $0x1f0] sm:$0xff]
      %v2052 = vld [vmem:[#allocation2 + $0x1f8] sm:$0xff]
      %v2053 = vld [vmem:[#allocation2 + $0x200] sm:$0xff]
      %v2054 = vld [vmem:[#allocation2 + $0x208] sm:$0xff]
      %v2055 = vld [vmem:[#allocation2 + $0x210] sm:$0xff]
      %v2056 = vld [vmem:[#allocation2 + $0x218] sm:$0xff]
      %v2057 = vld [vmem:[#allocation2 + $0x220] sm:$0xff]
      %v2058 = vld [vmem:[#allocation2 + $0x228] sm:$0xff]
      %v2059 = vld [vmem:[#allocation2 + $0x230] sm:$0xff]
      %v2060 = vld [vmem:[#allocation2 + $0x238] sm:$0xff]
      %v2061 = vld [vmem:[#allocation2 + $0x240] sm:$0xff]
      %v2062 = vld [vmem:[#allocation2 + $0x248] sm:$0xff]
      %v2063 = vld [vmem:[#allocation2 + $0x250] sm:$0xff]
      %v2064 = vld [vmem:[#allocation2 + $0x258] sm:$0xff]
      %v2065 = vld [vmem:[#allocation2 + $0x260] sm:$0xff]
      %v2066 = vld [vmem:[#allocation2 + $0x268] sm:$0xff]
      %v2067 = vld [vmem:[#allocation2 + $0x270] sm:$0xff]
      %v2068 = vld [vmem:[#allocation2 + $0x278] sm:$0xff]
      %v2069 = vld [vmem:[#allocation2 + $0x280] sm:$0xff]
      %v2070 = vld [vmem:[#allocation2 + $0x288] sm:$0xff]
      %v2071 = vld [vmem:[#allocation2 + $0x290] sm:$0xff]
      %v2072 = vld [vmem:[#allocation2 + $0x298] sm:$0xff]
      %v2073 = vld [vmem:[#allocation2 + $0x2a0] sm:$0xff]
      %v2074 = vld [vmem:[#allocation2 + $0x2a8] sm:$0xff]
      %v2075 = vld [vmem:[#allocation2 + $0x2b0] sm:$0xff]
      %v2076 = vld [vmem:[#allocation2 + $0x2b8] sm:$0xff]
      %v2077 = vld [vmem:[#allocation2 + $0x2c0] sm:$0xff]
      %v2078 = vld [vmem:[#allocation2 + $0x2c8] sm:$0xff]
      %v2079 = vld [vmem:[#allocation2 + $0x2d0] sm:$0xff]
      %v2080 = vld [vmem:[#allocation2 + $0x2d8] sm:$0xff]
      %v2081 = vld [vmem:[#allocation2 + $0x2e0] sm:$0xff]
      %v2082 = vld [vmem:[#allocation2 + $0x2e8] sm:$0xff]
      %v2083 = vld [vmem:[#allocation2 + $0x2f0] sm:$0xff]
      %v2084 = vld [vmem:[#allocation2 + $0x2f8] sm:$0xff]
      %v2085 = vld [vmem:[#allocation2 + $0x300] sm:$0xff]
      %v2086 = vld [vmem:[#allocation2 + $0x308] sm:$0xff]
      %v2087 = vld [vmem:[#allocation2 + $0x310] sm:$0xff]
      %v2088 = vld [vmem:[#allocation2 + $0x318] sm:$0xff]
      %v2089 = vld [vmem:[#allocation2 + $0x320] sm:$0xff]
      %v2090 = vld [vmem:[#allocation2 + $0x328] sm:$0xff]
      %v2091 = vld [vmem:[#allocation2 + $0x330] sm:$0xff]
      %v2092 = vld [vmem:[#allocation2 + $0x338] sm:$0xff]
      %v2093 = vld [vmem:[#allocation2 + $0x340] sm:$0xff]
      %v2094 = vld [vmem:[#allocation2 + $0x348] sm:$0xff]
      %v2095 = vld [vmem:[#allocation2 + $0x350] sm:$0xff]
      %v2096 = vld [vmem:[#allocation2 + $0x358] sm:$0xff]
      %v2097 = vld [vmem:[#allocation2 + $0x360] sm:$0xff]
      %v2098 = vld [vmem:[#allocation2 + $0x368] sm:$0xff]
      %v2099 = vld [vmem:[#allocation2 + $0x370] sm:$0xff]
      %v2100 = vld [vmem:[#allocation2 + $0x378] sm:$0xff]
      %v2101 = vld [vmem:[#allocation2 + $0x380] sm:$0xff]
      %v2102 = vld [vmem:[#allocation2 + $0x388] sm:$0xff]
      %v2103 = vld [vmem:[#allocation2 + $0x390] sm:$0xff]
      %v2104 = vld [vmem:[#allocation2 + $0x398] sm:$0xff]
      %v2105 = vld [vmem:[#allocation2 + $0x3a0] sm:$0xff]
      %v2106 = vld [vmem:[#allocation2 + $0x3a8] sm:$0xff]
      %v2107 = vld [vmem:[#allocation2 + $0x3b0] sm:$0xff]
      %v2108 = vld [vmem:[#allocation2 + $0x3b8] sm:$0xff]
      %v2109 = vld [vmem:[#allocation2 + $0x3c0] sm:$0xff]
      %v2110 = vld [vmem:[#allocation2 + $0x3c8] sm:$0xff]
      %v2111 = vld [vmem:[#allocation2 + $0x3d0] sm:$0xff]
      %v2112 = vld [vmem:[#allocation2 + $0x3d8] sm:$0xff]
      %v2113 = vld [vmem:[#allocation2 + $0x3e0] sm:$0xff]
      %v2114 = vld [vmem:[#allocation2 + $0x3e8] sm:$0xff]
      %v2115 = vld [vmem:[#allocation2 + $0x3f0] sm:$0xff]
      %v2116 = vld [vmem:[#allocation2 + $0x3f8] sm:$0xff]
      %v2117 = vand.u32 2147483647, %v1989
      %v2118 = vand.u32 2147483647, %v1990
      %v2119 = vand.u32 2147483647, %v1991
      %v2120 = vand.u32 2147483647, %v1992
      %v2121 = vand.u32 2147483647, %v1993
      %v2122 = vand.u32 2147483647, %v1994
      %v2123 = vand.u32 2147483647, %v1995
      %v2124 = vand.u32 2147483647, %v1996
      %v2125 = vand.u32 2147483647, %v1997
      %v2126 = vand.u32 2147483647, %v1998
      %v2127 = vand.u32 2147483647, %v1999
      %v2128 = vand.u32 2147483647, %v2000
      %v2129 = vand.u32 2147483647, %v2001
      %v2130 = vand.u32 2147483647, %v2002
      %v2131 = vand.u32 2147483647, %v2003
      %v2132 = vand.u32 2147483647, %v2004
      %v2133 = vand.u32 2147483647, %v2005
      %v2134 = vand.u32 2147483647, %v2006
      %v2135 = vand.u32 2147483647, %v2007
      %v2136 = vand.u32 2147483647, %v2008
      %v2137 = vand.u32 2147483647, %v2009
      %v2138 = vand.u32 2147483647, %v2010
      %v2139 = vand.u32 2147483647, %v2011
      %v2140 = vand.u32 2147483647, %v2012
      %v2141 = vand.u32 2147483647, %v2013
      %v2142 = vand.u32 2147483647, %v2014
      %v2143 = vand.u32 2147483647, %v2015
      %v2144 = vand.u32 2147483647, %v2016
      %v2145 = vand.u32 2147483647, %v2017
      %v2146 = vand.u32 2147483647, %v2018
      %v2147 = vand.u32 2147483647, %v2019
      %v2148 = vand.u32 2147483647, %v2020
      %v2149 = vand.u32 2147483647, %v2021
      %v2150 = vand.u32 2147483647, %v2022
      %v2151 = vand.u32 2147483647, %v2023
      %v2152 = vand.u32 2147483647, %v2024
      %v2153 = vand.u32 2147483647, %v2025
      %v2154 = vand.u32 2147483647, %v2026
      %v2155 = vand.u32 2147483647, %v2027
      %v2156 = vand.u32 2147483647, %v2028
      %v2157 = vand.u32 2147483647, %v2029
      %v2158 = vand.u32 2147483647, %v2030
      %v2159 = vand.u32 2147483647, %v2031
      %v2160 = vand.u32 2147483647, %v2032
      %v2161 = vand.u32 2147483647, %v2033
      %v2162 = vand.u32 2147483647, %v2034
      %v2163 = vand.u32 2147483647, %v2035
      %v2164 = vand.u32 2147483647, %v2036
      %v2165 = vand.u32 2147483647, %v2037
      %v2166 = vand.u32 2147483647, %v2038
      %v2167 = vand.u32 2147483647, %v2039
      %v2168 = vand.u32 2147483647, %v2040
      %v2169 = vand.u32 2147483647, %v2041
      %v2170 = vand.u32 2147483647, %v2042
      %v2171 = vand.u32 2147483647, %v2043
      %v2172 = vand.u32 2147483647, %v2044
      %v2173 = vand.u32 2147483647, %v2045
      %v2174 = vand.u32 2147483647, %v2046
      %v2175 = vand.u32 2147483647, %v2047
      %v2176 = vand.u32 2147483647, %v2048
      %v2177 = vand.u32 2147483647, %v2049
      %v2178 = vand.u32 2147483647, %v2050
      %v2179 = vand.u32 2147483647, %v2051
      %v2180 = vand.u32 2147483647, %v2052
      %v2181 = vand.u32 2147483647, %v2053
      %v2182 = vand.u32 2147483647, %v2054
      %v2183 = vand.u32 2147483647, %v2055
      %v2184 = vand.u32 2147483647, %v2056
      %v2185 = vand.u32 2147483647, %v2057
      %v2186 = vand.u32 2147483647, %v2058
      %v2187 = vand.u32 2147483647, %v2059
      %v2188 = vand.u32 2147483647, %v2060
      %v2189 = vand.u32 2147483647, %v2061
      %v2190 = vand.u32 2147483647, %v2062
      %v2191 = vand.u32 2147483647, %v2063
      %v2192 = vand.u32 2147483647, %v2064
      %v2193 = vand.u32 2147483647, %v2065
      %v2194 = vand.u32 2147483647, %v2066
      %v2195 = vand.u32 2147483647, %v2067
      %v2196 = vand.u32 2147483647, %v2068
      %v2197 = vand.u32 2147483647, %v2069
      %v2198 = vand.u32 2147483647, %v2070
      %v2199 = vand.u32 2147483647, %v2071
      %v2200 = vand.u32 2147483647, %v2072
      %v2201 = vand.u32 2147483647, %v2073
      %v2202 = vand.u32 2147483647, %v2074
      %v2203 = vand.u32 2147483647, %v2075
      %v2204 = vand.u32 2147483647, %v2076
      %v2205 = vand.u32 2147483647, %v2077
      %v2206 = vand.u32 2147483647, %v2078
      %v2207 = vand.u32 2147483647, %v2079
      %v2208 = vand.u32 2147483647, %v2080
      %v2209 = vand.u32 2147483647, %v2081
      %v2210 = vand.u32 2147483647, %v2082
      %v2211 = vand.u32 2147483647, %v2083
      %v2212 = vand.u32 2147483647, %v2084
      %v2213 = vand.u32 2147483647, %v2085
      %v2214 = vand.u32 2147483647, %v2086
      %v2215 = vand.u32 2147483647, %v2087
      %v2216 = vand.u32 2147483647, %v2088
      %v2217 = vand.u32 2147483647, %v2089
      %v2218 = vand.u32 2147483647, %v2090
      %v2219 = vand.u32 2147483647, %v2091
      %v2220 = vand.u32 2147483647, %v2092
      %v2221 = vand.u32 2147483647, %v2093
      %v2222 = vand.u32 2147483647, %v2094
      %v2223 = vand.u32 2147483647, %v2095
      %v2224 = vand.u32 2147483647, %v2096
      %v2225 = vand.u32 2147483647, %v2097
      %v2226 = vand.u32 2147483647, %v2098
      %v2227 = vand.u32 2147483647, %v2099
      %v2228 = vand.u32 2147483647, %v2100
      %v2229 = vand.u32 2147483647, %v2101
      %v2230 = vand.u32 2147483647, %v2102
      %v2231 = vand.u32 2147483647, %v2103
      %v2232 = vand.u32 2147483647, %v2104
      %v2233 = vand.u32 2147483647, %v2105
      %v2234 = vand.u32 2147483647, %v2106
      %v2235 = vand.u32 2147483647, %v2107
      %v2236 = vand.u32 2147483647, %v2108
      %v2237 = vand.u32 2147483647, %v2109
      %v2238 = vand.u32 2147483647, %v2110
      %v2239 = vand.u32 2147483647, %v2111
      %v2240 = vand.u32 2147483647, %v2112
      %v2241 = vand.u32 2147483647, %v2113
      %v2242 = vand.u32 2147483647, %v2114
      %v2243 = vand.u32 2147483647, %v2115
      %v2244 = vand.u32 2147483647, %v2116
      %2277 = vrot.lane.b32.xlu0 %v2149, 32
      %v2278 = vpop.permute.xlu0 %2277
      %2279 = vrot.lane.b32.xlu0 %v2150, 32
      %v2280 = vpop.permute.xlu0 %2279
      %2281 = vrot.lane.b32.xlu0 %v2151, 32
      %v2282 = vpop.permute.xlu0 %2281
      %2283 = vrot.lane.b32.xlu0 %v2152, 32
      %v2284 = vpop.permute.xlu0 %2283
      %2285 = vrot.lane.b32.xlu0 %v2153, 32
      %v2286 = vpop.permute.xlu0 %2285
      %2287 = vrot.lane.b32.xlu0 %v2154, 32
      %v2288 = vpop.permute.xlu0 %2287
      %2289 = vrot.lane.b32.xlu0 %v2155, 32
      %v2290 = vpop.permute.xlu0 %2289
      %2291 = vrot.lane.b32.xlu0 %v2156, 32
      %v2292 = vpop.permute.xlu0 %2291
      %2293 = vrot.lane.b32.xlu0 %v2157, 32
      %v2294 = vpop.permute.xlu0 %2293
      %2295 = vrot.lane.b32.xlu0 %v2158, 32
      %v2296 = vpop.permute.xlu0 %2295
      %2297 = vrot.lane.b32.xlu0 %v2159, 32
      %v2298 = vpop.permute.xlu0 %2297
      %2299 = vrot.lane.b32.xlu0 %v2160, 32
      %v2300 = vpop.permute.xlu0 %2299
      %2301 = vrot.lane.b32.xlu0 %v2161, 32
      %v2302 = vpop.permute.xlu0 %2301
      %2303 = vrot.lane.b32.xlu0 %v2162, 32
      %v2304 = vpop.permute.xlu0 %2303
      %2305 = vrot.lane.b32.xlu0 %v2163, 32
      %v2306 = vpop.permute.xlu0 %2305
      %2307 = vrot.lane.b32.xlu0 %v2164, 32
      %v2308 = vpop.permute.xlu0 %2307
      %2309 = vrot.lane.b32.xlu0 %v2165, 32
      %v2310 = vpop.permute.xlu0 %2309
      %2311 = vrot.lane.b32.xlu0 %v2166, 32
      %v2312 = vpop.permute.xlu0 %2311
      %2313 = vrot.lane.b32.xlu0 %v2167, 32
      %v2314 = vpop.permute.xlu0 %2313
      %2315 = vrot.lane.b32.xlu0 %v2168, 32
      %v2316 = vpop.permute.xlu0 %2315
      %2317 = vrot.lane.b32.xlu0 %v2169, 32
      %v2318 = vpop.permute.xlu0 %2317
      %2319 = vrot.lane.b32.xlu0 %v2170, 32
      %v2320 = vpop.permute.xlu0 %2319
      %2321 = vrot.lane.b32.xlu0 %v2171, 32
      %v2322 = vpop.permute.xlu0 %2321
      %2323 = vrot.lane.b32.xlu0 %v2172, 32
      %v2324 = vpop.permute.xlu0 %2323
      %2325 = vrot.lane.b32.xlu0 %v2173, 32
      %v2326 = vpop.permute.xlu0 %2325
      %2327 = vrot.lane.b32.xlu0 %v2174, 32
      %v2328 = vpop.permute.xlu0 %2327
      %2329 = vrot.lane.b32.xlu0 %v2175, 32
      %v2330 = vpop.permute.xlu0 %2329
      %2331 = vrot.lane.b32.xlu0 %v2176, 32
      %v2332 = vpop.permute.xlu0 %2331
      %2333 = vrot.lane.b32.xlu0 %v2177, 32
      %v2334 = vpop.permute.xlu0 %2333
      %2335 = vrot.lane.b32.xlu0 %v2178, 32
      %v2336 = vpop.permute.xlu0 %2335
      %2337 = vrot.lane.b32.xlu0 %v2179, 32
      %v2338 = vpop.permute.xlu0 %2337
      %2339 = vrot.lane.b32.xlu0 %v2180, 32
      %v2340 = vpop.permute.xlu0 %2339
      %2405 = vrot.lane.b32.xlu0 %v2181, 64
      %v2406 = vpop.permute.xlu0 %2405
      %2407 = vrot.lane.b32.xlu0 %v2182, 64
      %v2408 = vpop.permute.xlu0 %2407
      %2409 = vrot.lane.b32.xlu0 %v2183, 64
      %v2410 = vpop.permute.xlu0 %2409
      %2411 = vrot.lane.b32.xlu0 %v2184, 64
      %v2412 = vpop.permute.xlu0 %2411
      %2413 = vrot.lane.b32.xlu0 %v2185, 64
      %v2414 = vpop.permute.xlu0 %2413
      %2415 = vrot.lane.b32.xlu0 %v2186, 64
      %v2416 = vpop.permute.xlu0 %2415
      %2417 = vrot.lane.b32.xlu0 %v2187, 64
      %v2418 = vpop.permute.xlu0 %2417
      %2419 = vrot.lane.b32.xlu0 %v2188, 64
      %v2420 = vpop.permute.xlu0 %2419
      %2421 = vrot.lane.b32.xlu0 %v2189, 64
      %v2422 = vpop.permute.xlu0 %2421
      %2423 = vrot.lane.b32.xlu0 %v2190, 64
      %v2424 = vpop.permute.xlu0 %2423
      %2425 = vrot.lane.b32.xlu0 %v2191, 64
      %v2426 = vpop.permute.xlu0 %2425
      %2427 = vrot.lane.b32.xlu0 %v2192, 64
      %v2428 = vpop.permute.xlu0 %2427
      %2429 = vrot.lane.b32.xlu0 %v2193, 64
      %v2430 = vpop.permute.xlu0 %2429
      %2431 = vrot.lane.b32.xlu0 %v2194, 64
      %v2432 = vpop.permute.xlu0 %2431
      %2433 = vrot.lane.b32.xlu0 %v2195, 64
      %v2434 = vpop.permute.xlu0 %2433
      %2435 = vrot.lane.b32.xlu0 %v2196, 64
      %v2436 = vpop.permute.xlu0 %2435
      %2437 = vrot.lane.b32.xlu0 %v2197, 64
      %v2438 = vpop.permute.xlu0 %2437
      %2439 = vrot.lane.b32.xlu0 %v2198, 64
      %v2440 = vpop.permute.xlu0 %2439
      %2441 = vrot.lane.b32.xlu0 %v2199, 64
      %v2442 = vpop.permute.xlu0 %2441
      %2443 = vrot.lane.b32.xlu0 %v2200, 64
      %v2444 = vpop.permute.xlu0 %2443
      %2445 = vrot.lane.b32.xlu0 %v2201, 64
      %v2446 = vpop.permute.xlu0 %2445
      %2447 = vrot.lane.b32.xlu0 %v2202, 64
      %v2448 = vpop.permute.xlu0 %2447
      %2449 = vrot.lane.b32.xlu0 %v2203, 64
      %v2450 = vpop.permute.xlu0 %2449
      %2451 = vrot.lane.b32.xlu0 %v2204, 64
      %v2452 = vpop.permute.xlu0 %2451
      %2453 = vrot.lane.b32.xlu0 %v2205, 64
      %v2454 = vpop.permute.xlu0 %2453
      %2455 = vrot.lane.b32.xlu0 %v2206, 64
      %v2456 = vpop.permute.xlu0 %2455
      %2457 = vrot.lane.b32.xlu0 %v2207, 64
      %v2458 = vpop.permute.xlu0 %2457
      %2459 = vrot.lane.b32.xlu0 %v2208, 64
      %v2460 = vpop.permute.xlu0 %2459
      %2461 = vrot.lane.b32.xlu0 %v2209, 64
      %v2462 = vpop.permute.xlu0 %2461
      %2463 = vrot.lane.b32.xlu0 %v2210, 64
      %v2464 = vpop.permute.xlu0 %2463
      %2465 = vrot.lane.b32.xlu0 %v2211, 64
      %v2466 = vpop.permute.xlu0 %2465
      %2467 = vrot.lane.b32.xlu0 %v2212, 64
      %v2468 = vpop.permute.xlu0 %2467
      %2533 = vrot.lane.b32.xlu0 %v2213, 96
      %v2534 = vpop.permute.xlu0 %2533
      %2535 = vrot.lane.b32.xlu0 %v2214, 96
      %v2536 = vpop.permute.xlu0 %2535
      %2537 = vrot.lane.b32.xlu0 %v2215, 96
      %v2538 = vpop.permute.xlu0 %2537
      %2539 = vrot.lane.b32.xlu0 %v2216, 96
      %v2540 = vpop.permute.xlu0 %2539
      %2541 = vrot.lane.b32.xlu0 %v2217, 96
      %v2542 = vpop.permute.xlu0 %2541
      %2543 = vrot.lane.b32.xlu0 %v2218, 96
      %v2544 = vpop.permute.xlu0 %2543
      %2545 = vrot.lane.b32.xlu0 %v2219, 96
      %v2546 = vpop.permute.xlu0 %2545
      %2547 = vrot.lane.b32.xlu0 %v2220, 96
      %v2548 = vpop.permute.xlu0 %2547
      %2549 = vrot.lane.b32.xlu0 %v2221, 96
      %v2550 = vpop.permute.xlu0 %2549
      %2551 = vrot.lane.b32.xlu0 %v2222, 96
      %v2552 = vpop.permute.xlu0 %2551
      %2553 = vrot.lane.b32.xlu0 %v2223, 96
      %v2554 = vpop.permute.xlu0 %2553
      %2555 = vrot.lane.b32.xlu0 %v2224, 96
      %v2556 = vpop.permute.xlu0 %2555
      %2557 = vrot.lane.b32.xlu0 %v2225, 96
      %v2558 = vpop.permute.xlu0 %2557
      %2559 = vrot.lane.b32.xlu0 %v2226, 96
      %v2560 = vpop.permute.xlu0 %2559
      %2561 = vrot.lane.b32.xlu0 %v2227, 96
      %v2562 = vpop.permute.xlu0 %2561
      %2563 = vrot.lane.b32.xlu0 %v2228, 96
      %v2564 = vpop.permute.xlu0 %2563
      %2565 = vrot.lane.b32.xlu0 %v2229, 96
      %v2566 = vpop.permute.xlu0 %2565
      %2567 = vrot.lane.b32.xlu0 %v2230, 96
      %v2568 = vpop.permute.xlu0 %2567
      %2569 = vrot.lane.b32.xlu0 %v2231, 96
      %v2570 = vpop.permute.xlu0 %2569
      %2571 = vrot.lane.b32.xlu0 %v2232, 96
      %v2572 = vpop.permute.xlu0 %2571
      %2573 = vrot.lane.b32.xlu0 %v2233, 96
      %v2574 = vpop.permute.xlu0 %2573
      %2575 = vrot.lane.b32.xlu0 %v2234, 96
      %v2576 = vpop.permute.xlu0 %2575
      %2577 = vrot.lane.b32.xlu0 %v2235, 96
      %v2578 = vpop.permute.xlu0 %2577
      %2579 = vrot.lane.b32.xlu0 %v2236, 96
      %v2580 = vpop.permute.xlu0 %2579
      %2581 = vrot.lane.b32.xlu0 %v2237, 96
      %v2582 = vpop.permute.xlu0 %2581
      %2583 = vrot.lane.b32.xlu0 %v2238, 96
      %v2584 = vpop.permute.xlu0 %2583
      %2585 = vrot.lane.b32.xlu0 %v2239, 96
      %v2586 = vpop.permute.xlu0 %2585
      %2587 = vrot.lane.b32.xlu0 %v2240, 96
      %v2588 = vpop.permute.xlu0 %2587
      %2589 = vrot.lane.b32.xlu0 %v2241, 96
      %v2590 = vpop.permute.xlu0 %2589
      %2591 = vrot.lane.b32.xlu0 %v2242, 96
      %v2592 = vpop.permute.xlu0 %2591
      %2593 = vrot.lane.b32.xlu0 %v2243, 96
      %v2594 = vpop.permute.xlu0 %2593
      %2595 = vrot.lane.b32.xlu0 %v2244, 96
      %v2596 = vpop.permute.xlu0 %2595
      %v2629 = vsel %vm1857, %v2117, %v2278
      %v2630 = vsel %vm1857, %v2118, %v2280
      %v2631 = vsel %vm1857, %v2119, %v2282
      %v2632 = vsel %vm1857, %v2120, %v2284
      %v2633 = vsel %vm1857, %v2121, %v2286
      %v2634 = vsel %vm1857, %v2122, %v2288
      %v2635 = vsel %vm1857, %v2123, %v2290
      %v2636 = vsel %vm1857, %v2124, %v2292
      %v2637 = vsel %vm1857, %v2125, %v2294
      %v2638 = vsel %vm1857, %v2126, %v2296
      %v2639 = vsel %vm1857, %v2127, %v2298
      %v2640 = vsel %vm1857, %v2128, %v2300
      %v2641 = vsel %vm1857, %v2129, %v2302
      %v2642 = vsel %vm1857, %v2130, %v2304
      %v2643 = vsel %vm1857, %v2131, %v2306
      %v2644 = vsel %vm1857, %v2132, %v2308
      %v2645 = vsel %vm1857, %v2133, %v2310
      %v2646 = vsel %vm1857, %v2134, %v2312
      %v2647 = vsel %vm1857, %v2135, %v2314
      %v2648 = vsel %vm1857, %v2136, %v2316
      %v2649 = vsel %vm1857, %v2137, %v2318
      %v2650 = vsel %vm1857, %v2138, %v2320
      %v2651 = vsel %vm1857, %v2139, %v2322
      %v2652 = vsel %vm1857, %v2140, %v2324
      %v2653 = vsel %vm1857, %v2141, %v2326
      %v2654 = vsel %vm1857, %v2142, %v2328
      %v2655 = vsel %vm1857, %v2143, %v2330
      %v2656 = vsel %vm1857, %v2144, %v2332
      %v2657 = vsel %vm1857, %v2145, %v2334
      %v2658 = vsel %vm1857, %v2146, %v2336
      %v2659 = vsel %vm1857, %v2147, %v2338
      %v2660 = vsel %vm1857, %v2148, %v2340
      %vm2661 = vcmask 523264
      %v2662 = vsel %vm2661, %v2629, %v2406
      %v2663 = vsel %vm2661, %v2630, %v2408
      %v2664 = vsel %vm2661, %v2631, %v2410
      %v2665 = vsel %vm2661, %v2632, %v2412
      %v2666 = vsel %vm2661, %v2633, %v2414
      %v2667 = vsel %vm2661, %v2634, %v2416
      %v2668 = vsel %vm2661, %v2635, %v2418
      %v2669 = vsel %vm2661, %v2636, %v2420
      %v2670 = vsel %vm2661, %v2637, %v2422
      %v2671 = vsel %vm2661, %v2638, %v2424
      %v2672 = vsel %vm2661, %v2639, %v2426
      %v2673 = vsel %vm2661, %v2640, %v2428
      %v2674 = vsel %vm2661, %v2641, %v2430
      %v2675 = vsel %vm2661, %v2642, %v2432
      %v2676 = vsel %vm2661, %v2643, %v2434
      %v2677 = vsel %vm2661, %v2644, %v2436
      %v2678 = vsel %vm2661, %v2645, %v2438
      %v2679 = vsel %vm2661, %v2646, %v2440
      %v2680 = vsel %vm2661, %v2647, %v2442
      %v2681 = vsel %vm2661, %v2648, %v2444
      %v2682 = vsel %vm2661, %v2649, %v2446
      %v2683 = vsel %vm2661, %v2650, %v2448
      %v2684 = vsel %vm2661, %v2651, %v2450
      %v2685 = vsel %vm2661, %v2652, %v2452
      %v2686 = vsel %vm2661, %v2653, %v2454
      %v2687 = vsel %vm2661, %v2654, %v2456
      %v2688 = vsel %vm2661, %v2655, %v2458
      %v2689 = vsel %vm2661, %v2656, %v2460
      %v2690 = vsel %vm2661, %v2657, %v2462
      %v2691 = vsel %vm2661, %v2658, %v2464
      %v2692 = vsel %vm2661, %v2659, %v2466
      %v2693 = vsel %vm2661, %v2660, %v2468
      %vm2694 = vcmask 785408
      %v2695 = vsel %vm2694, %v2662, %v2534
      %v2696 = vsel %vm2694, %v2663, %v2536
      %v2697 = vsel %vm2694, %v2664, %v2538
      %v2698 = vsel %vm2694, %v2665, %v2540
      %v2699 = vsel %vm2694, %v2666, %v2542
      %v2700 = vsel %vm2694, %v2667, %v2544
      %v2701 = vsel %vm2694, %v2668, %v2546
      %v2702 = vsel %vm2694, %v2669, %v2548
      %v2703 = vsel %vm2694, %v2670, %v2550
      %v2704 = vsel %vm2694, %v2671, %v2552
      %v2705 = vsel %vm2694, %v2672, %v2554
      %v2706 = vsel %vm2694, %v2673, %v2556
      %v2707 = vsel %vm2694, %v2674, %v2558
      %v2708 = vsel %vm2694, %v2675, %v2560
      %v2709 = vsel %vm2694, %v2676, %v2562
      %v2710 = vsel %vm2694, %v2677, %v2564
      %v2711 = vsel %vm2694, %v2678, %v2566
      %v2712 = vsel %vm2694, %v2679, %v2568
      %v2713 = vsel %vm2694, %v2680, %v2570
      %v2714 = vsel %vm2694, %v2681, %v2572
      %v2715 = vsel %vm2694, %v2682, %v2574
      %v2716 = vsel %vm2694, %v2683, %v2576
      %v2717 = vsel %vm2694, %v2684, %v2578
      %v2718 = vsel %vm2694, %v2685, %v2580
      %v2719 = vsel %vm2694, %v2686, %v2582
      %v2720 = vsel %vm2694, %v2687, %v2584
      %v2721 = vsel %vm2694, %v2688, %v2586
      %v2722 = vsel %vm2694, %v2689, %v2588
      %v2723 = vsel %vm2694, %v2690, %v2590
      %v2724 = vsel %vm2694, %v2691, %v2592
      %v2725 = vsel %vm2694, %v2692, %v2594
      %v2726 = vsel %vm2694, %v2693, %v2596
      %v2727 = vpack.c.bf16 %v2696, %v2695
      %v2728 = vpack.c.bf16 %v2698, %v2697
      %v2729 = vpack.c.bf16 %v2700, %v2699
      %v2730 = vpack.c.bf16 %v2702, %v2701
      %v2731 = vpack.c.bf16 %v2704, %v2703
      %v2732 = vpack.c.bf16 %v2706, %v2705
      %v2733 = vpack.c.bf16 %v2708, %v2707
      %v2734 = vpack.c.bf16 %v2710, %v2709
      %v2735 = vpack.c.bf16 %v2712, %v2711
      %v2736 = vpack.c.bf16 %v2714, %v2713
      %v2737 = vpack.c.bf16 %v2716, %v2715
      %v2738 = vpack.c.bf16 %v2718, %v2717
      %v2739 = vpack.c.bf16 %v2720, %v2719
      %v2740 = vpack.c.bf16 %v2722, %v2721
      %v2741 = vpack.c.bf16 %v2724, %v2723
      %v2742 = vpack.c.bf16 %v2726, %v2725
      %v2759 = vunpack.c.l.b16 %v2727
      %v2760 = vunpack.c.h.b16 %v2727
      %v2761 = vunpack.c.l.b16 %v2728
      %v2762 = vunpack.c.h.b16 %v2728
      %v2763 = vunpack.c.l.b16 %v2729
      %v2764 = vunpack.c.h.b16 %v2729
      %v2765 = vunpack.c.l.b16 %v2730
      %v2766 = vunpack.c.h.b16 %v2730
      %v2767 = vunpack.c.l.b16 %v2731
      %v2768 = vunpack.c.h.b16 %v2731
      %v2769 = vunpack.c.l.b16 %v2732
      %v2770 = vunpack.c.h.b16 %v2732
      %v2771 = vunpack.c.l.b16 %v2733
      %v2772 = vunpack.c.h.b16 %v2733
      %v2773 = vunpack.c.l.b16 %v2734
      %v2774 = vunpack.c.h.b16 %v2734
      %v2775 = vunpack.c.l.b16 %v2735
      %v2776 = vunpack.c.h.b16 %v2735
      %v2777 = vunpack.c.l.b16 %v2736
      %v2778 = vunpack.c.h.b16 %v2736
      %v2779 = vunpack.c.l.b16 %v2737
      %v2780 = vunpack.c.h.b16 %v2737
      %v2781 = vunpack.c.l.b16 %v2738
      %v2782 = vunpack.c.h.b16 %v2738
      %v2783 = vunpack.c.l.b16 %v2739
      %v2784 = vunpack.c.h.b16 %v2739
      %v2785 = vunpack.c.l.b16 %v2740
      %v2786 = vunpack.c.h.b16 %v2740
      %v2787 = vunpack.c.l.b16 %v2741
      %v2788 = vunpack.c.h.b16 %v2741
      %v2789 = vunpack.c.l.b16 %v2742
      %v2790 = vunpack.c.h.b16 %v2742
      %v2791 = vpack.c.b16 %v2759, %v2759
      %v2792 = vpack.c.b16 %v2760, %v2760
      %v2793 = vpack.c.b16 %v2761, %v2761
      %v2794 = vpack.c.b16 %v2762, %v2762
      %v2795 = vpack.c.b16 %v2763, %v2763
      %v2796 = vpack.c.b16 %v2764, %v2764
      %v2797 = vpack.c.b16 %v2765, %v2765
      %v2798 = vpack.c.b16 %v2766, %v2766
      %v2799 = vpack.c.b16 %v2767, %v2767
      %v2800 = vpack.c.b16 %v2768, %v2768
      %v2801 = vpack.c.b16 %v2769, %v2769
      %v2802 = vpack.c.b16 %v2770, %v2770
      %v2803 = vpack.c.b16 %v2771, %v2771
      %v2804 = vpack.c.b16 %v2772, %v2772
      %v2805 = vpack.c.b16 %v2773, %v2773
      %v2806 = vpack.c.b16 %v2774, %v2774
      %v2807 = vpack.c.b16 %v2775, %v2775
      %v2808 = vpack.c.b16 %v2776, %v2776
      %v2809 = vpack.c.b16 %v2777, %v2777
      %v2810 = vpack.c.b16 %v2778, %v2778
      %v2811 = vpack.c.b16 %v2779, %v2779
      %v2812 = vpack.c.b16 %v2780, %v2780
      %v2813 = vpack.c.b16 %v2781, %v2781
      %v2814 = vpack.c.b16 %v2782, %v2782
      %v2815 = vpack.c.b16 %v2783, %v2783
      %v2816 = vpack.c.b16 %v2784, %v2784
      %v2817 = vpack.c.b16 %v2785, %v2785
      %v2818 = vpack.c.b16 %v2786, %v2786
      %v2819 = vpack.c.b16 %v2787, %v2787
      %v2820 = vpack.c.b16 %v2788, %v2788
      %v2821 = vpack.c.b16 %v2789, %v2789
      %v2822 = vpack.c.b16 %v2790, %v2790
      %2855 = vst [vmem:[#allocation6] sm:$0xf] %v2791
      %2856 = vst [vmem:[#allocation6 + $0x4] sm:$0xf] %v2792
      %2857 = vst [vmem:[#allocation6 + $0x8] sm:$0xf] %v2793
      %2858 = vst [vmem:[#allocation6 + $0xc] sm:$0xf] %v2794
      %2859 = vst [vmem:[#allocation6 + $0x10] sm:$0xf] %v2795
      %2860 = vst [vmem:[#allocation6 + $0x14] sm:$0xf] %v2796
      %2861 = vst [vmem:[#allocation6 + $0x18] sm:$0xf] %v2797
      %2862 = vst [vmem:[#allocation6 + $0x1c] sm:$0xf] %v2798
      %2863 = vst [vmem:[#allocation6 + $0x20] sm:$0xf] %v2799
      %2864 = vst [vmem:[#allocation6 + $0x24] sm:$0xf] %v2800
      %2865 = vst [vmem:[#allocation6 + $0x28] sm:$0xf] %v2801
      %2866 = vst [vmem:[#allocation6 + $0x2c] sm:$0xf] %v2802
      %2867 = vst [vmem:[#allocation6 + $0x30] sm:$0xf] %v2803
      %2868 = vst [vmem:[#allocation6 + $0x34] sm:$0xf] %v2804
      %2869 = vst [vmem:[#allocation6 + $0x38] sm:$0xf] %v2805
      %2870 = vst [vmem:[#allocation6 + $0x3c] sm:$0xf] %v2806
      %2871 = vst [vmem:[#allocation6 + $0x40] sm:$0xf] %v2807
      %2872 = vst [vmem:[#allocation6 + $0x44] sm:$0xf] %v2808
      %2873 = vst [vmem:[#allocation6 + $0x48] sm:$0xf] %v2809
      %2874 = vst [vmem:[#allocation6 + $0x4c] sm:$0xf] %v2810
      %2875 = vst [vmem:[#allocation6 + $0x50] sm:$0xf] %v2811
      %2876 = vst [vmem:[#allocation6 + $0x54] sm:$0xf] %v2812
      %2877 = vst [vmem:[#allocation6 + $0x58] sm:$0xf] %v2813
      %2878 = vst [vmem:[#allocation6 + $0x5c] sm:$0xf] %v2814
      %2879 = vst [vmem:[#allocation6 + $0x60] sm:$0xf] %v2815
      %2880 = vst [vmem:[#allocation6 + $0x64] sm:$0xf] %v2816
      %2881 = vst [vmem:[#allocation6 + $0x68] sm:$0xf] %v2817
      %2882 = vst [vmem:[#allocation6 + $0x6c] sm:$0xf] %v2818
      %2883 = vst [vmem:[#allocation6 + $0x70] sm:$0xf] %v2819
      %2884 = vst [vmem:[#allocation6 + $0x74] sm:$0xf] %v2820
      %2885 = vst [vmem:[#allocation6 + $0x78] sm:$0xf] %v2821
      %2886 = vst [vmem:[#allocation6 + $0x7c] sm:$0xf] %v2822
    $region21: #{tpu_custom_call.1} parent=1 // pred_fallthru
      _
    // Predicated region
    $region22: #{tpu_custom_call.1} parent=1 // pred_check
      _
    $region23: #{tpu_custom_call.1} parent=1 // pred_check_branch
      %2888 = sbr.rel (0) target = $region25
    $region24: #{tpu_custom_call.1} parent=1 // pred_region
      %s2890 = ssub.s32 2048, 2048
      %2891 = vsyncadd [#allocation5], %s2890
      %s2892 = sshll.u32 [#allocation6], 4
      %s2893 = int_to_ptr.vmem [resolvable:$true] %s2892
      %2898 = dma.vmem_to_hbm [thread:$0]  %s2893, 2048, %s2, [#allocation5], 64, 64, 4
    $region25: #{tpu_custom_call.1} parent=1 // pred_fallthru
      _
    // Predicated region
    $region26: #{tpu_custom_call.1} parent=1 // pred_check
      _
    $region27: #{tpu_custom_call.1} parent=1 // pred_check_branch
      %2900 = sbr.rel (0) target = $region29
    $region28: #{tpu_custom_call.1} parent=1 // pred_region
      %2901 = dma.done [#allocation5], 2048
    $region29: #{tpu_custom_call.1} parent=1 // pred_fallthru
      _
    %2902 = vsyncpa [#allocation4], 1
    %2903 = vsyncpa [#allocation5], 1

</llo_original>
